<compile_context>
chip_gen: v6e
topology: v6e:2x2x1
jax: 0.10.0
libtpu: 0.0.40
codegen_flags: <defaults>
</compile_context>

<pallas_src>
import functools
import math

import jax
import jax.numpy as jnp
from jax.experimental import pallas as pl
from jax.experimental.pallas import tpu as pltpu

D_IN = 128
D_HID = 512
D_OUT = 128

_INV_SQRT2 = 1.0 / math.sqrt(2.0)
_SQRT_2_OVER_PI = math.sqrt(2.0 / math.pi)


def _cdiv(a, b):
    return -(-a // b)


def _round_up(a, b):
    return _cdiv(a, b) * b


def _mlp_kernel(x_ref, w1_ref, b1_ref, w2_ref, b2_ref, o_ref, *, approx_gelu):
    """One (channels x spatial) tile of the fused MLP.

    x_ref:  (128, TS) f32   channels on sublanes, spatial tokens on lanes
    w1_ref: (512, 128) bf16  fc1.weight (torch layout)
    b1_ref: (512, 1)   f32   fc1.bias
    w2_ref: (128, 512) bf16  fc2.weight (torch layout)
    b2_ref: (128, 1)   f32   fc2.bias
    o_ref:  (128, TS)  f32
    """
    x = x_ref[...].astype(jnp.bfloat16)                       # (128, TS)
    # fc1: (512, 128) @ (128, TS) -> (512, TS), f32 accumulation on the MXU.
    h = jnp.dot(w1_ref[...], x, preferred_element_type=jnp.float32) + b1_ref[...]
    if approx_gelu:
        # tanh-form GELU: tanh goes to the EUP slot; short f32 VALU chain.
        inner = _SQRT_2_OVER_PI * (h + 0.044715 * (h * h * h))
        h = 0.5 * h * (1.0 + jnp.tanh(inner))
    else:
        # Exact (erf) GELU, matching torch.nn.functional.gelu default.
        h = 0.5 * h * (1.0 + jax.lax.erf(h * _INV_SQRT2))
    # fc2: (128, 512) @ (512, TS) -> (128, TS).
    o = jnp.dot(w2_ref[...], h.astype(jnp.bfloat16),
                preferred_element_type=jnp.float32) + b2_ref[...]
    o_ref[...] = o.astype(o_ref.dtype)


def _choose_ts(bsz, s, ts_max):
    """Pick a lane-dense spatial tile (multiple of 128) with enough grid steps."""
    ts = min(ts_max, _round_up(s, 128))
    ts = max(128, _round_up(ts, 128))
    # Keep at least ~4 grid steps when possible (>=2 per TC on v7x megacore,
    # plus something for the double-buffered pipeline to overlap).
    while ts > 128 and bsz * _cdiv(s, ts) < 4:
        ts = _round_up(ts // 2, 128)
    return ts


def _mlp_nchw_tiles(x3, w1_bf16, b1, w2_bf16, b2, ts, approx_gelu):
    """x3: (B, 128, S) f32; S need not be a multiple of ts (ragged edge masked)."""
    bsz, _, s = x3.shape
    grid = (bsz, _cdiv(s, ts))
    kernel = functools.partial(_mlp_kernel, approx_gelu=approx_gelu)
    return pl.pallas_call(
        kernel,
        out_shape=jax.ShapeDtypeStruct((bsz, D_OUT, s), x3.dtype),
        grid_spec=pltpu.PrefetchScalarGridSpec(
            num_scalar_prefetch=0,
            grid=grid,
            in_specs=[
                # batch dim squeezed (None) -> kernel sees 2-D (128, ts) tiles
                pl.BlockSpec((None, D_IN, ts), lambda b, j: (b, 0, j)),
                pl.BlockSpec((D_HID, D_IN), lambda b, j: (0, 0)),
                pl.BlockSpec((D_HID, 1), lambda b, j: (0, 0)),
                pl.BlockSpec((D_OUT, D_HID), lambda b, j: (0, 0)),
                pl.BlockSpec((D_OUT, 1), lambda b, j: (0, 0)),
            ],
            out_specs=pl.BlockSpec((None, D_OUT, ts), lambda b, j: (b, 0, j)),
        ),
        compiler_params=pltpu.CompilerParams(
            dimension_semantics=("parallel", "parallel"),
            # ~12 MiB working set at ts=2048; stays under 32 MiB on every
            # generation including v7x's 64 MiB physical VMEM per TC.
            vmem_limit_bytes=32 * 1024 * 1024,
        ),
    )(x3, w1_bf16, b1, w2_bf16, b2)


def mlp_forward(x_nchw, w1, b1, w2, b2, *, ts_max=2048, approx_gelu=True):
    """x_nchw: (B, 128, H, W) f32 -> (B, 128, H, W), matching the PyTorch module.

    w1: (512, 128) fc1.weight, b1: (512, 1) fc1.bias,
    w2: (128, 512) fc2.weight, b2: (128, 1) fc2.bias  (torch orientations).
    """
    bsz, c, h, w = x_nchw.shape
    assert c == D_IN, "Mlp is hard-wired to 128 input channels (fc1: 128->512)"
    s = h * w
    # Free reshape: collapse trailing spatial dims, keep channel-major layout.
    x3 = x_nchw.reshape(bsz, c, s)

    # Only the tiny S<128 case is padded (one lane-dense tile); larger ragged
    # spatial extents are handled by grid masking inside the kernel -- no
    # whole-array HBM pad/crop passes.
    s_run = s
    if s < 128:
        s_run = 128
        x3 = jnp.pad(x3, ((0, 0), (0, 0), (0, s_run - s)))

    ts = _choose_ts(bsz, s_run, ts_max)

    # bf16 weights feed the MXU natively; accumulation stays f32.
    y3 = _mlp_nchw_tiles(
        x3, w1.astype(jnp.bfloat16), b1, w2.astype(jnp.bfloat16), b2, ts, approx_gelu
    )
    if s_run != s:
        y3 = y3[:, :, :s]
    return y3.reshape(bsz, D_OUT, h, w)


def init_params(key):
    """Deterministic init mirroring the module's _init_weights.

    fc1.weight: xavier_uniform over (512, 128); fc2.weight over (128, 512).
    Biases ~ N(0, 1e-6).  Stored in torch orientation (out_features, in_features),
    which is exactly what the channel-contraction kernel consumes.
    """
    k1, k2, k3, k4 = jax.random.split(key, 4)
    bound1 = math.sqrt(6.0 / (D_IN + D_HID))
    bound2 = math.sqrt(6.0 / (D_HID + D_OUT))
    w1 = jax.random.uniform(k1, (D_HID, D_IN), jnp.float32, -bound1, bound1)
    w2 = jax.random.uniform(k2, (D_OUT, D_HID), jnp.float32, -bound2, bound2)
    b1 = 1e-6 * jax.random.normal(k3, (D_HID, 1), jnp.float32)
    b2 = 1e-6 * jax.random.normal(k4, (D_OUT, 1), jnp.float32)
    return w1, b1, w2, b2


def _reference(x_nchw, w1, b1, w2, b2):
    """Pure-JAX f32 reference of the exact PyTorch math (token formulation)."""
    bsz, c, h, w = x_nchw.shape
    x_tok = jnp.transpose(x_nchw, (0, 2, 3, 1)).reshape(-1, c)
    hid = x_tok @ w1.T + b1.reshape(-1)
    hid = 0.5 * hid * (1.0 + jax.lax.erf(hid * _INV_SQRT2))
    y_tok = hid @ w2.T + b2.reshape(-1)
    return jnp.transpose(y_tok.reshape(bsz, h, w, D_OUT), (0, 3, 1, 2))


def _check(x, w1, b1, w2, b2, **kw):
    y = jax.block_until_ready(mlp_forward(x, w1, b1, w2, b2, **kw))
    y_ref = _reference(x, w1, b1, w2, b2)
    assert y.shape == x.shape
    err = float(jnp.max(jnp.abs(y - y_ref)))
    scale = float(jnp.max(jnp.abs(y_ref)))
    # bf16 matmuls (+ tanh-GELU approx) vs the exact f32 reference -> loose tol.
    assert err <= 5e-2 * scale + 1e-2, (err, scale)


if __name__ == "__main__":
    key = jax.random.PRNGKey(0)
    kx1, kx2, kp = jax.random.split(key, 3)
    w1, b1, w2, b2 = init_params(kp)

    # Case 1: small spatial (S=64 < 128) -> padded to one lane-dense 128 tile.
    x_small = jax.random.normal(kx1, (2, D_IN, 8, 8), jnp.float32)
    _check(x_small, w1, b1, w2, b2)                      # fast tanh-GELU path
    _check(x_small, w1, b1, w2, b2, approx_gelu=False)   # exact erf path

    # Case 2: S=600 (not a multiple of the tile) -- exercises the ragged-grid
    # masked edge block and the lane-dense multi-tile path, no wrapper pad/crop.
    x_big = jax.random.normal(kx2, (2, D_IN, 20, 30), jnp.float32)
    _check(x_big, w1, b1, w2, b2)

    print("KERNEL_OK")
</pallas_src>

<mosaic_0001>
module attributes {stable_mosaic.version = 11 : i64} {
  func.func @_mlp_kernel(%arg0: i32, %arg1: i32, %arg2: memref<1x128x128xf32, #tpu.memory_space<vmem>>, %arg3: memref<512x128xbf16, #tpu.memory_space<vmem>>, %arg4: memref<512x1xf32, #tpu.memory_space<vmem>>, %arg5: memref<128x512xbf16, #tpu.memory_space<vmem>>, %arg6: memref<128x1xf32, #tpu.memory_space<vmem>>, %arg7: memref<1x128x128xf32, #tpu.memory_space<vmem>>) attributes {dimension_semantics = [#tpu.dimension_semantics<parallel>, #tpu.dimension_semantics<parallel>], iteration_bounds = array<i64: 2, 1>, scalar_prefetch = 0 : i64, scratch_operands = 0 : i64, tpu.core_type = #tpu.core_type<tc>, window_params = [{transform_indices = @transform_0, window_bounds = array<i64: 1, 128, 128>}, {pipeline_mode = #tpu.pipeline_mode<synchronous>, transform_indices = @transform_1, window_bounds = array<i64: 512, 128>}, {pipeline_mode = #tpu.pipeline_mode<synchronous>, transform_indices = @transform_2, window_bounds = array<i64: 512, 1>}, {pipeline_mode = #tpu.pipeline_mode<synchronous>, transform_indices = @transform_3, window_bounds = array<i64: 128, 512>}, {pipeline_mode = #tpu.pipeline_mode<synchronous>, transform_indices = @transform_4, window_bounds = array<i64: 128, 1>}, {transform_indices = @transform_5, window_bounds = array<i64: 1, 128, 128>}]} {
    %c0 = arith.constant 0 : index
    %c0_0 = arith.constant 0 : index
    %c0_1 = arith.constant 0 : index
    %0 = vector.load %arg2[%c0, %c0_0, %c0_1] : memref<1x128x128xf32, #tpu.memory_space<vmem>>, vector<1x128x128xf32>
    %1 = vector.shape_cast %0 : vector<1x128x128xf32> to vector<128x128xf32>
    %2 = arith.truncf %1 : vector<128x128xf32> to vector<128x128xbf16>
    %c0_2 = arith.constant 0 : index
    %c0_3 = arith.constant 0 : index
    %3 = vector.load %arg3[%c0_2, %c0_3] : memref<512x128xbf16, #tpu.memory_space<vmem>>, vector<512x128xbf16>
    %cst = arith.constant dense<0.000000e+00> : vector<512x128xf32>
    %4 = tpu.matmul %3, %2, %cst {dimension_numbers = #tpu.dot_dimension_numbers<[1], [0], [0], [1], [0, 0, 1, 1], [], []>} : vector<512x128xbf16>, vector<128x128xbf16>, vector<512x128xf32> -> vector<512x128xf32>
    %c0_4 = arith.constant 0 : index
    %c0_5 = arith.constant 0 : index
    %5 = vector.load %arg4[%c0_4, %c0_5] : memref<512x1xf32, #tpu.memory_space<vmem>>, vector<512x1xf32>
    %6 = vector.broadcast %5 : vector<512x1xf32> to vector<512x128xf32>
    %7 = arith.addf %4, %6 : vector<512x128xf32>
    %8 = arith.mulf %7, %7 : vector<512x128xf32>
    %9 = arith.mulf %8, %7 : vector<512x128xf32>
    %cst_6 = arith.constant 4.471500e-02 : f32
    %10 = vector.broadcast %cst_6 : f32 to vector<512x128xf32>
    %11 = arith.mulf %10, %9 : vector<512x128xf32>
    %12 = arith.addf %7, %11 : vector<512x128xf32>
    %cst_7 = arith.constant 0.797884583 : f32
    %13 = vector.broadcast %cst_7 : f32 to vector<512x128xf32>
    %14 = arith.mulf %13, %12 : vector<512x128xf32>
    %cst_8 = arith.constant 5.000000e-01 : f32
    %15 = vector.broadcast %cst_8 : f32 to vector<512x128xf32>
    %16 = arith.mulf %15, %7 : vector<512x128xf32>
    %17 = math.tanh %14 : vector<512x128xf32>
    %cst_9 = arith.constant 1.000000e+00 : f32
    %18 = vector.broadcast %cst_9 : f32 to vector<512x128xf32>
    %19 = arith.addf %18, %17 : vector<512x128xf32>
    %20 = arith.mulf %16, %19 : vector<512x128xf32>
    %c0_10 = arith.constant 0 : index
    %c0_11 = arith.constant 0 : index
    %21 = vector.load %arg5[%c0_10, %c0_11] : memref<128x512xbf16, #tpu.memory_space<vmem>>, vector<128x512xbf16>
    %22 = arith.truncf %20 : vector<512x128xf32> to vector<512x128xbf16>
    %cst_12 = arith.constant dense<0.000000e+00> : vector<128x128xf32>
    %23 = tpu.matmul %21, %22, %cst_12 {dimension_numbers = #tpu.dot_dimension_numbers<[1], [0], [0], [1], [0, 0, 1, 1], [], []>} : vector<128x512xbf16>, vector<512x128xbf16>, vector<128x128xf32> -> vector<128x128xf32>
    %c0_13 = arith.constant 0 : index
    %c0_14 = arith.constant 0 : index
    %24 = vector.load %arg6[%c0_13, %c0_14] : memref<128x1xf32, #tpu.memory_space<vmem>>, vector<128x1xf32>
    %25 = vector.broadcast %24 : vector<128x1xf32> to vector<128x128xf32>
    %26 = arith.addf %23, %25 : vector<128x128xf32>
    %c0_15 = arith.constant 0 : index
    %c0_16 = arith.constant 0 : index
    %c0_17 = arith.constant 0 : index
    %27 = vector.load %arg7[%c0_15, %c0_16, %c0_17] : memref<1x128x128xf32, #tpu.memory_space<vmem>>, vector<1x128x128xf32>
    %28 = vector.shape_cast %27 : vector<1x128x128xf32> to vector<128x128xf32>
    %29 = vector.shape_cast %26 : vector<128x128xf32> to vector<1x128x128xf32>
    tpu.vector_store %arg7[%c0_15, %c0_16, %c0_17], %29 {strides = array<i32>} : memref<1x128x128xf32, #tpu.memory_space<vmem>>, vector<1x128x128xf32>,
    return
  }
  func.func @transform_0(%arg0: i32, %arg1: i32) -> (i32, i32, i32) {
    %c0_i32 = arith.constant 0 : i32
    %c0_i32_0 = arith.constant 0 : i32
    return %arg0, %c0_i32, %arg1 : i32, i32, i32
  }
  func.func @transform_1(%arg0: i32, %arg1: i32) -> (i32, i32) {
    %c0_i32 = arith.constant 0 : i32
    %c0_i32_0 = arith.constant 0 : i32
    %c0_i32_1 = arith.constant 0 : i32
    return %c0_i32, %c0_i32_0 : i32, i32
  }
  func.func @transform_2(%arg0: i32, %arg1: i32) -> (i32, i32) {
    %c0_i32 = arith.constant 0 : i32
    %c0_i32_0 = arith.constant 0 : i32
    %c0_i32_1 = arith.constant 0 : i32
    return %c0_i32, %c0_i32_0 : i32, i32
  }
  func.func @transform_3(%arg0: i32, %arg1: i32) -> (i32, i32) {
    %c0_i32 = arith.constant 0 : i32
    %c0_i32_0 = arith.constant 0 : i32
    %c0_i32_1 = arith.constant 0 : i32
    return %c0_i32, %c0_i32_0 : i32, i32
  }
  func.func @transform_4(%arg0: i32, %arg1: i32) -> (i32, i32) {
    %c0_i32 = arith.constant 0 : i32
    %c0_i32_0 = arith.constant 0 : i32
    %c0_i32_1 = arith.constant 0 : i32
    return %c0_i32, %c0_i32_0 : i32, i32
  }
  func.func @transform_5(%arg0: i32, %arg1: i32) -> (i32, i32, i32) {
    %c0_i32 = arith.constant 0 : i32
    %c0_i32_0 = arith.constant 0 : i32
    return %arg0, %c0_i32, %arg1 : i32, i32, i32
  }
}

</mosaic_0001>

<llo_original>
// kernel: tpu_custom_call.1
$region0: #{tpu_custom_call.1}
  #allocation0 [shape = 'u32[]', space=smem, size = 0x4, offset = 0x4, fixed_abs, tag = 'smem constant byte address 0x4 - core index']
  #allocation1 [shape = 'u32[144,128]{1,0:T(1,128)}', space=vmem, size = 0x12000, scoped, tag = 'internal scratch']
  %s0 = inlined_call_operand.vmem [shape: f32[2,128,128], index: 0, kind: input, shape index: {}]
  %s1 = inlined_call_operand.vmem [shape: bf16[512,128], index: 1, kind: input, shape index: {}]
  %s2 = inlined_call_operand.vmem [shape: f32[512,1], index: 2, kind: input, shape index: {}]
  %s3 = inlined_call_operand.hbm [shape: bf16[128,512], index: 3, kind: input, shape index: {}]
  %s4 = inlined_call_operand.vmem [shape: f32[128,1], index: 4, kind: input, shape index: {}]
  %s5 = inlined_call_operand.hbm [shape: f32[2,128,128], index: 5, kind: output, shape index: {}]
  %s6 = sld [smem:[#allocation0]]
  $region57: #{tpu_custom_call.1} parent=0
    _
  %s8 = ssub.s32 1, %s6
  %s9 = scalar_select 0, %s8, %s6
  $region1: #{tpu_custom_call.1} parent=0
    #allocation2 [shape = 'u8[131072]{0}', space=vmem, size = 0x20000, scoped, tag = 'input window, operand 3, single buffered']
    #allocation3 [shape = 's32[2]{0}', space=sflag, size = 0x8, scoped, tag = 'scoped memory for tpu_custom_call.1']
    #allocation4 [shape = 's32[2]{0}', space=sflag, size = 0x8, scoped, tag = 'scoped memory for tpu_custom_call.1']
    #allocation5 [shape = 'u8[131072]{0}', space=vmem, size = 0x20000, scoped, tag = 'output window, operand 0']
    %10 = vsyncpa [#allocation3], 0
    %11 = vsyncpa [#allocation4], 0
    %s12 = scalar_lea.sflag [#allocation4], 1
    %13 = vsyncpa %s12, 0
    loop: start=0, step=1, limit=4
    $region2: #{tpu_custom_call.1} parent=1 // loop_pre_header
      _
    $region3: #{tpu_custom_call.1} parent=1 // loop_header
      %s15 = sphi 0, %s19
      %p16 = scmp.ge.s32.totalorder %s15, 4
      %s22 = sphi 0, %s34
      %s23 = sphi 0, %s30
      %s24 = sphi 0, %s22
      %s25 = sphi 0, %s23
      %s26 = sphi 0, %s24
      %s27 = sphi 0, %s25
      %s39 = sphi 0, %s41
      %s42 = sphi 0, %s39
      %s43 = sphi 0, %s42
      %s59 = sphi 0, %s43
      %s63 = sphi 0, %s63
      %s65 = sphi 0, %s63
      %s66 = sphi 0, %s65
      %s80 = sphi 0, %s66
      %s84 = sphi 0, %s84
      %s86 = sphi 0, %s84
      %s87 = sphi 0, %s86
      %s101 = sphi 0, %s87
      %s105 = sphi 0, %s105
      %s107 = sphi 0, %s105
      %s108 = sphi 0, %s107
      %s122 = sphi 0, %s108
      %s126 = sphi 0, %s126
      %s128 = sphi 0, %s126
      %s129 = sphi 0, %s128
      %s143 = sphi 0, %s129
      %s151 = sphi 0, %s153
      %s154 = sphi 0, %s151
      %s155 = sphi 0, %s154
      %s171 = sphi 0, %s155
    $region4: #{tpu_custom_call.1} parent=1 // loop_header_branch
      %18 = sbr.rel (%p16) target = $region8
    $region5: #{tpu_custom_call.1} parent=1 // loop_body
      %s20 = ssub.s32 %s15, 1
      %s21 = ssub.s32 %s15, 2
      %s28 = sadd.s32 1, %s23
      %p29 = scmp.ge.s32.totalorder %s28, 1
      %s30 = scalar_select %p29, 0, %s28
      %s31 = sadd.s32 1, %s22
      %s32 = scalar_select %p29, %s31, %s22
      %p33 = scmp.ge.s32.totalorder %s32, 2
      %s34 = scalar_select %p33, 0, %s32
      %s35 = ssub.s32 %s22, %s34
      %s36 = ssub.s32 %s23, %s30
      %s37 = sor.u32 %s35, %s36
      %p38 = scmp.eq.s32.totalorder %s37, 0
      %s40 = sadd.s32 %s39, 1
      %s41 = scalar_select %p38, %s39, %s40
      %p44 = pneg %p38
      %p45 = scmp.eq.s32.totalorder %s15, 1
      %p46 = por %p44, %p45
      %p47 = scmp.ne.s32.totalorder %s39, %s42
      %p48 = scmp.eq.s32.totalorder %s15, 0
      %p49 = por %p47, %p48
      %p50 = scmp.ne.s32.totalorder %s39, %s42
      %p51 = scmp.eq.s32.totalorder %s20, 1
      %p52 = por %p50, %p51
      %p53 = scmp.ne.s32.totalorder %s42, %s43
      %p54 = scmp.eq.s32.totalorder %s20, 0
      %p55 = por %p53, %p54
      %p56 = scmp.ne.s32.totalorder %s42, %s43
      %p57 = scmp.eq.s32.totalorder %s21, 1
      %p58 = por %p56, %p57
      %p60 = scmp.ne.s32.totalorder %s43, %s59
      %p61 = scmp.eq.s32.totalorder %s21, 0
      %p62 = por %p60, %p61
      %s64 = sadd.s32 %s63, 1
      %p67 = scmp.eq.s32.totalorder %s15, 1
      %p68 = scmp.ne.s32.totalorder %s63, %s65
      %p69 = scmp.eq.s32.totalorder %s15, 0
      %p70 = por %p68, %p69
      %p71 = scmp.ne.s32.totalorder %s63, %s65
      %p72 = scmp.eq.s32.totalorder %s20, 1
      %p73 = por %p71, %p72
      %p74 = scmp.ne.s32.totalorder %s65, %s66
      %p75 = scmp.eq.s32.totalorder %s20, 0
      %p76 = por %p74, %p75
      %p77 = scmp.ne.s32.totalorder %s65, %s66
      %p78 = scmp.eq.s32.totalorder %s21, 1
      %p79 = por %p77, %p78
      %p81 = scmp.ne.s32.totalorder %s66, %s80
      %p82 = scmp.eq.s32.totalorder %s21, 0
      %p83 = por %p81, %p82
      %s85 = sadd.s32 %s84, 1
      %p88 = scmp.eq.s32.totalorder %s15, 1
      %p89 = scmp.ne.s32.totalorder %s84, %s86
      %p90 = scmp.eq.s32.totalorder %s15, 0
      %p91 = por %p89, %p90
      %p92 = scmp.ne.s32.totalorder %s84, %s86
      %p93 = scmp.eq.s32.totalorder %s20, 1
      %p94 = por %p92, %p93
      %p95 = scmp.ne.s32.totalorder %s86, %s87
      %p96 = scmp.eq.s32.totalorder %s20, 0
      %p97 = por %p95, %p96
      %p98 = scmp.ne.s32.totalorder %s86, %s87
      %p99 = scmp.eq.s32.totalorder %s21, 1
      %p100 = por %p98, %p99
      %p102 = scmp.ne.s32.totalorder %s87, %s101
      %p103 = scmp.eq.s32.totalorder %s21, 0
      %p104 = por %p102, %p103
      %s106 = sadd.s32 %s105, 1
      %p109 = scmp.eq.s32.totalorder %s15, 1
      %p110 = scmp.ne.s32.totalorder %s105, %s107
      %p111 = scmp.eq.s32.totalorder %s15, 0
      %p112 = por %p110, %p111
      %p113 = scmp.ne.s32.totalorder %s105, %s107
      %p114 = scmp.eq.s32.totalorder %s20, 1
      %p115 = por %p113, %p114
      %p116 = scmp.ne.s32.totalorder %s107, %s108
      %p117 = scmp.eq.s32.totalorder %s20, 0
      %p118 = por %p116, %p117
      %p119 = scmp.ne.s32.totalorder %s107, %s108
      %p120 = scmp.eq.s32.totalorder %s21, 1
      %p121 = por %p119, %p120
      %p123 = scmp.ne.s32.totalorder %s108, %s122
      %p124 = scmp.eq.s32.totalorder %s21, 0
      %p125 = por %p123, %p124
      %s127 = sadd.s32 %s126, 1
      %p130 = scmp.eq.s32.totalorder %s15, 1
      %p131 = scmp.ne.s32.totalorder %s126, %s128
      %p132 = scmp.eq.s32.totalorder %s15, 0
      %p133 = por %p131, %p132
      %p134 = scmp.ne.s32.totalorder %s126, %s128
      %p135 = scmp.eq.s32.totalorder %s20, 1
      %p136 = por %p134, %p135
      %p137 = scmp.ne.s32.totalorder %s128, %s129
      %p138 = scmp.eq.s32.totalorder %s20, 0
      %p139 = por %p137, %p138
      %p140 = scmp.ne.s32.totalorder %s128, %s129
      %p141 = scmp.eq.s32.totalorder %s21, 1
      %p142 = por %p140, %p141
      %p144 = scmp.ne.s32.totalorder %s129, %s143
      %p145 = scmp.eq.s32.totalorder %s21, 0
      %p146 = por %p144, %p145
      %s147 = ssub.s32 %s22, %s34
      %s148 = ssub.s32 %s23, %s30
      %s149 = sor.u32 %s147, %s148
      %p150 = scmp.eq.s32.totalorder %s149, 0
      %s152 = sadd.s32 %s151, 1
      %s153 = scalar_select %p150, %s151, %s152
      %p156 = pneg %p150
      %p157 = scmp.eq.s32.totalorder %s15, 1
      %p158 = por %p156, %p157
      %p159 = scmp.ne.s32.totalorder %s151, %s154
      %p160 = scmp.eq.s32.totalorder %s15, 0
      %p161 = por %p159, %p160
      %p162 = scmp.ne.s32.totalorder %s151, %s154
      %p163 = scmp.eq.s32.totalorder %s20, 1
      %p164 = por %p162, %p163
      %p165 = scmp.ne.s32.totalorder %s154, %s155
      %p166 = scmp.eq.s32.totalorder %s20, 0
      %p167 = por %p165, %p166
      %p168 = scmp.ne.s32.totalorder %s154, %s155
      %p169 = scmp.eq.s32.totalorder %s21, 1
      %p170 = por %p168, %p169
      %p172 = scmp.ne.s32.totalorder %s155, %s171
      %p173 = scmp.eq.s32.totalorder %s21, 0
      %p174 = por %p172, %p173
      %p175 = scmp.le.s32.totalorder 1, %s15
      %p176 = scmp.lt.s32.totalorder %s15, 3
      %p177 = pnand %p175, %p176
      %p178 = pneg %p177
      // Predicated region
      $region9: #{tpu_custom_call.1} parent=5 // pred_check
        _
      $region10: #{tpu_custom_call.1} parent=5 // pred_check_branch
        %180 = sbr.rel (%p177) target = $region12
      $region11: #{tpu_custom_call.1} parent=5 // pred_region
        %s181 = ssub.s32 %s15, 1
        // Predicated region
        $region13: #{tpu_custom_call.1} parent=11 // pred_check
          %p182 = pneg %p76
        $region14: #{tpu_custom_call.1} parent=11 // pred_check_branch
          %184 = sbr.rel (%p182) target = $region16
        $region15: #{tpu_custom_call.1} parent=11 // pred_region
          _
        $region16: #{tpu_custom_call.1} parent=11 // pred_fallthru
          _
        // Predicated region
        $region17: #{tpu_custom_call.1} parent=11 // pred_check
          %p185 = pneg %p97
        $region18: #{tpu_custom_call.1} parent=11 // pred_check_branch
          %187 = sbr.rel (%p185) target = $region20
        $region19: #{tpu_custom_call.1} parent=11 // pred_region
          _
        $region20: #{tpu_custom_call.1} parent=11 // pred_fallthru
          _
        // Predicated region
        $region21: #{tpu_custom_call.1} parent=11 // pred_check
          %p188 = pneg %p118
        $region22: #{tpu_custom_call.1} parent=11 // pred_check_branch
          %190 = sbr.rel (%p188) target = $region24
        $region23: #{tpu_custom_call.1} parent=11 // pred_region
          %s192 = ssub.s32 4096, 4096
          %193 = vsyncadd [#allocation3], %s192
          %s194 = sshll.u32 [#allocation2], 4
          %s195 = int_to_ptr.vmem [resolvable:$true] %s194
          %200 = dma.hbm_to_vmem [thread:$0]  %s3, 4096, %s195, [#allocation3], 256, 256, 16
        $region24: #{tpu_custom_call.1} parent=11 // pred_fallthru
          _
        // Predicated region
        $region25: #{tpu_custom_call.1} parent=11 // pred_check
          %p201 = pneg %p139
        $region26: #{tpu_custom_call.1} parent=11 // pred_check_branch
          %203 = sbr.rel (%p201) target = $region28
        $region27: #{tpu_custom_call.1} parent=11 // pred_region
          _
        $region28: #{tpu_custom_call.1} parent=11 // pred_fallthru
          _
      $region12: #{tpu_custom_call.1} parent=5 // pred_fallthru
        _
      %p204 = scmp.lt.s32.totalorder %s15, 2
      // Predicated region
      $region29: #{tpu_custom_call.1} parent=5 // pred_check
        %p205 = pneg %p204
      $region30: #{tpu_custom_call.1} parent=5 // pred_check_branch
        %207 = sbr.rel (%p205) target = $region32
      $region31: #{tpu_custom_call.1} parent=5 // pred_region
        // Predicated region
        $region33: #{tpu_custom_call.1} parent=31 // pred_check
          %p208 = pneg %p49
        $region34: #{tpu_custom_call.1} parent=31 // pred_check_branch
          %210 = sbr.rel (%p208) target = $region36
        $region35: #{tpu_custom_call.1} parent=31 // pred_region
          %p211 = scmp.lt.s32.totalorder %s22, 1
          %s212 = scalar_select %p211, %s22, 1
          %p213 = scmp.lt.s32.totalorder %s23, 0
          %s214 = scalar_select %p213, %s23, 0
          %s215 = smul.addr %s212, 16
          %s216 = sadd.s32 %s214, %s215
          %s217 = smul.addr %s216, 8
          %s218 = scalar_lea.vmem %s0, %s217
        $region36: #{tpu_custom_call.1} parent=31 // pred_fallthru
          _
      $region32: #{tpu_custom_call.1} parent=5 // pred_fallthru
        _
      %p219 = scmp.le.s32.totalorder 1, %s15
      %p220 = scmp.lt.s32.totalorder %s15, 3
      %p221 = pnand %p219, %p220
      %p222 = pneg %p221
      // Predicated region
      $region37: #{tpu_custom_call.1} parent=5 // pred_check
        _
      $region38: #{tpu_custom_call.1} parent=5 // pred_check_branch
        %224 = sbr.rel (%p221) target = $region40
      $region39: #{tpu_custom_call.1} parent=5 // pred_region
        %s225 = ssub.s32 %s15, 1
        // Predicated region
        $region41: #{tpu_custom_call.1} parent=39 // pred_check
          %p226 = pneg %p118
        $region42: #{tpu_custom_call.1} parent=39 // pred_check_branch
          %228 = sbr.rel (%p226) target = $region44
        $region43: #{tpu_custom_call.1} parent=39 // pred_region
          %229 = dma.done [#allocation3], 4096
        $region44: #{tpu_custom_call.1} parent=39 // pred_fallthru
          _
        %p230 = scmp.lt.s32.totalorder %s24, 1
        %s231 = scalar_select %p230, %s24, 1
        %p232 = scmp.lt.s32.totalorder %s25, 0
        %s233 = scalar_select %p232, %s25, 0
        %s234 = smul.addr %s231, 16
        %s235 = sadd.s32 %s233, %s234
        %s236 = smul.addr %s235, 8
        %s237 = scalar_lea.vmem %s0, %s236
        %p238 = pneg %p55
        %p239 = pneg %p52
        %p240 = pneg %p76
        %p241 = pneg %p73
        %p242 = pneg %p97
        %p243 = pneg %p94
        %p244 = pneg %p118
        %p245 = pneg %p115
        %p246 = pneg %p139
        %p247 = pneg %p136
        %p248 = pneg %p167
        %p249 = pneg %p164
        %s250 = sand.u32 %s154, 1
        %s251 = scalar_lea.sflag [#allocation4], %s250
        %s252 = sand.u32 %s154, 1
        %s253 = smul.addr %s252, 128
        %s254 = scalar_lea.vmem [#allocation5], %s253
        %p255 = scmp.lt.s32.totalorder %s24, 1
        %s256 = scalar_select %p255, %s24, 1
        %p257 = scmp.lt.s32.totalorder %s25, 0
        %s258 = scalar_select %p257, %s25, 0
        %s259 = smul.addr %s256, 16
        %s260 = sadd.s32 %s258, %s259
        %s261 = smul.addr %s260, 8
        %s262 = scalar_lea.vmem %s0, %s261
        %v264 = vld [vmem:[%s262] sm:$0xff]
        %v265 = vld [vmem:[%s262 + $0x8] sm:$0xff]
        %v266 = vld [vmem:[%s262 + $0x10] sm:$0xff]
        %v267 = vld [vmem:[%s262 + $0x18] sm:$0xff]
        %v268 = vld [vmem:[%s262 + $0x20] sm:$0xff]
        %v269 = vld [vmem:[%s262 + $0x28] sm:$0xff]
        %v270 = vld [vmem:[%s262 + $0x30] sm:$0xff]
        %v271 = vld [vmem:[%s262 + $0x38] sm:$0xff]
        %v272 = vld [vmem:[%s262 + $0x40] sm:$0xff]
        %v273 = vld [vmem:[%s262 + $0x48] sm:$0xff]
        %v274 = vld [vmem:[%s262 + $0x50] sm:$0xff]
        %v275 = vld [vmem:[%s262 + $0x58] sm:$0xff]
        %v276 = vld [vmem:[%s262 + $0x60] sm:$0xff]
        %v277 = vld [vmem:[%s262 + $0x68] sm:$0xff]
        %v278 = vld [vmem:[%s262 + $0x70] sm:$0xff]
        %v279 = vld [vmem:[%s262 + $0x78] sm:$0xff]
        %v280 = vpack.c.bf16 %v265, %v264
        %v281 = vpack.c.bf16 %v267, %v266
        %v282 = vpack.c.bf16 %v269, %v268
        %v283 = vpack.c.bf16 %v271, %v270
        %v284 = vpack.c.bf16 %v273, %v272
        %v285 = vpack.c.bf16 %v275, %v274
        %v286 = vpack.c.bf16 %v277, %v276
        %v287 = vpack.c.bf16 %v279, %v278
        %v288 = vld [vmem:[%s1] sm:$0xf]
        %v289 = vld [vmem:[%s1 + $0x4] sm:$0xf]
        %v290 = vld [vmem:[%s1 + $0x8] sm:$0xf]
        %v291 = vld [vmem:[%s1 + $0xc] sm:$0xf]
        %v292 = vld [vmem:[%s1 + $0x10] sm:$0xf]
        %v293 = vld [vmem:[%s1 + $0x14] sm:$0xf]
        %v294 = vld [vmem:[%s1 + $0x18] sm:$0xf]
        %v295 = vld [vmem:[%s1 + $0x1c] sm:$0xf]
        %v296 = vld [vmem:[%s1 + $0x20] sm:$0xf]
        %v297 = vld [vmem:[%s1 + $0x24] sm:$0xf]
        %v298 = vld [vmem:[%s1 + $0x28] sm:$0xf]
        %v299 = vld [vmem:[%s1 + $0x2c] sm:$0xf]
        %v300 = vld [vmem:[%s1 + $0x30] sm:$0xf]
        %v301 = vld [vmem:[%s1 + $0x34] sm:$0xf]
        %v302 = vld [vmem:[%s1 + $0x38] sm:$0xf]
        %v303 = vld [vmem:[%s1 + $0x3c] sm:$0xf]
        %v304 = vld [vmem:[%s1 + $0x40] sm:$0xf]
        %v305 = vld [vmem:[%s1 + $0x44] sm:$0xf]
        %v306 = vld [vmem:[%s1 + $0x48] sm:$0xf]
        %v307 = vld [vmem:[%s1 + $0x4c] sm:$0xf]
        %v308 = vld [vmem:[%s1 + $0x50] sm:$0xf]
        %v309 = vld [vmem:[%s1 + $0x54] sm:$0xf]
        %v310 = vld [vmem:[%s1 + $0x58] sm:$0xf]
        %v311 = vld [vmem:[%s1 + $0x5c] sm:$0xf]
        %v312 = vld [vmem:[%s1 + $0x60] sm:$0xf]
        %v313 = vld [vmem:[%s1 + $0x64] sm:$0xf]
        %v314 = vld [vmem:[%s1 + $0x68] sm:$0xf]
        %v315 = vld [vmem:[%s1 + $0x6c] sm:$0xf]
        %v316 = vld [vmem:[%s1 + $0x70] sm:$0xf]
        %v317 = vld [vmem:[%s1 + $0x74] sm:$0xf]
        %v318 = vld [vmem:[%s1 + $0x78] sm:$0xf]
        %v319 = vld [vmem:[%s1 + $0x7c] sm:$0xf]
        %v320 = vld [vmem:[%s1 + $0x80] sm:$0xf]
        %v321 = vld [vmem:[%s1 + $0x84] sm:$0xf]
        %v322 = vld [vmem:[%s1 + $0x88] sm:$0xf]
        %v323 = vld [vmem:[%s1 + $0x8c] sm:$0xf]
        %v324 = vld [vmem:[%s1 + $0x90] sm:$0xf]
        %v325 = vld [vmem:[%s1 + $0x94] sm:$0xf]
        %v326 = vld [vmem:[%s1 + $0x98] sm:$0xf]
        %v327 = vld [vmem:[%s1 + $0x9c] sm:$0xf]
        %v328 = vld [vmem:[%s1 + $0xa0] sm:$0xf]
        %v329 = vld [vmem:[%s1 + $0xa4] sm:$0xf]
        %v330 = vld [vmem:[%s1 + $0xa8] sm:$0xf]
        %v331 = vld [vmem:[%s1 + $0xac] sm:$0xf]
        %v332 = vld [vmem:[%s1 + $0xb0] sm:$0xf]
        %v333 = vld [vmem:[%s1 + $0xb4] sm:$0xf]
        %v334 = vld [vmem:[%s1 + $0xb8] sm:$0xf]
        %v335 = vld [vmem:[%s1 + $0xbc] sm:$0xf]
        %v336 = vld [vmem:[%s1 + $0xc0] sm:$0xf]
        %v337 = vld [vmem:[%s1 + $0xc4] sm:$0xf]
        %v338 = vld [vmem:[%s1 + $0xc8] sm:$0xf]
        %v339 = vld [vmem:[%s1 + $0xcc] sm:$0xf]
        %v340 = vld [vmem:[%s1 + $0xd0] sm:$0xf]
        %v341 = vld [vmem:[%s1 + $0xd4] sm:$0xf]
        %v342 = vld [vmem:[%s1 + $0xd8] sm:$0xf]
        %v343 = vld [vmem:[%s1 + $0xdc] sm:$0xf]
        %v344 = vld [vmem:[%s1 + $0xe0] sm:$0xf]
        %v345 = vld [vmem:[%s1 + $0xe4] sm:$0xf]
        %v346 = vld [vmem:[%s1 + $0xe8] sm:$0xf]
        %v347 = vld [vmem:[%s1 + $0xec] sm:$0xf]
        %v348 = vld [vmem:[%s1 + $0xf0] sm:$0xf]
        %v349 = vld [vmem:[%s1 + $0xf4] sm:$0xf]
        %v350 = vld [vmem:[%s1 + $0xf8] sm:$0xf]
        %v351 = vld [vmem:[%s1 + $0xfc] sm:$0xf]
        %v352 = vld [vmem:[%s2] sm:$0xff]
        %v353 = vld [vmem:[%s2 + $0x8] sm:$0xff]
        %v354 = vld [vmem:[%s2 + $0x10] sm:$0xff]
        %v355 = vld [vmem:[%s2 + $0x18] sm:$0xff]
        %v356 = vld [vmem:[%s2 + $0x20] sm:$0xff]
        %v357 = vld [vmem:[%s2 + $0x28] sm:$0xff]
        %v358 = vld [vmem:[%s2 + $0x30] sm:$0xff]
        %v359 = vld [vmem:[%s2 + $0x38] sm:$0xff]
        %v360 = vld [vmem:[%s2 + $0x40] sm:$0xff]
        %v361 = vld [vmem:[%s2 + $0x48] sm:$0xff]
        %v362 = vld [vmem:[%s2 + $0x50] sm:$0xff]
        %v363 = vld [vmem:[%s2 + $0x58] sm:$0xff]
        %v364 = vld [vmem:[%s2 + $0x60] sm:$0xff]
        %v365 = vld [vmem:[%s2 + $0x68] sm:$0xff]
        %v366 = vld [vmem:[%s2 + $0x70] sm:$0xff]
        %v367 = vld [vmem:[%s2 + $0x78] sm:$0xff]
        %v368 = vld [vmem:[%s2 + $0x80] sm:$0xff]
        %v369 = vld [vmem:[%s2 + $0x88] sm:$0xff]
        %v370 = vld [vmem:[%s2 + $0x90] sm:$0xff]
        %v371 = vld [vmem:[%s2 + $0x98] sm:$0xff]
        %v372 = vld [vmem:[%s2 + $0xa0] sm:$0xff]
        %v373 = vld [vmem:[%s2 + $0xa8] sm:$0xff]
        %v374 = vld [vmem:[%s2 + $0xb0] sm:$0xff]
        %v375 = vld [vmem:[%s2 + $0xb8] sm:$0xff]
        %v376 = vld [vmem:[%s2 + $0xc0] sm:$0xff]
        %v377 = vld [vmem:[%s2 + $0xc8] sm:$0xff]
        %v378 = vld [vmem:[%s2 + $0xd0] sm:$0xff]
        %v379 = vld [vmem:[%s2 + $0xd8] sm:$0xff]
        %v380 = vld [vmem:[%s2 + $0xe0] sm:$0xff]
        %v381 = vld [vmem:[%s2 + $0xe8] sm:$0xff]
        %v382 = vld [vmem:[%s2 + $0xf0] sm:$0xff]
        %v383 = vld [vmem:[%s2 + $0xf8] sm:$0xff]
        %v384 = vld [vmem:[%s2 + $0x100] sm:$0xff]
        %v385 = vld [vmem:[%s2 + $0x108] sm:$0xff]
        %v386 = vld [vmem:[%s2 + $0x110] sm:$0xff]
        %v387 = vld [vmem:[%s2 + $0x118] sm:$0xff]
        %v388 = vld [vmem:[%s2 + $0x120] sm:$0xff]
        %v389 = vld [vmem:[%s2 + $0x128] sm:$0xff]
        %v390 = vld [vmem:[%s2 + $0x130] sm:$0xff]
        %v391 = vld [vmem:[%s2 + $0x138] sm:$0xff]
        %v392 = vld [vmem:[%s2 + $0x140] sm:$0xff]
        %v393 = vld [vmem:[%s2 + $0x148] sm:$0xff]
        %v394 = vld [vmem:[%s2 + $0x150] sm:$0xff]
        %v395 = vld [vmem:[%s2 + $0x158] sm:$0xff]
        %v396 = vld [vmem:[%s2 + $0x160] sm:$0xff]
        %v397 = vld [vmem:[%s2 + $0x168] sm:$0xff]
        %v398 = vld [vmem:[%s2 + $0x170] sm:$0xff]
        %v399 = vld [vmem:[%s2 + $0x178] sm:$0xff]
        %v400 = vld [vmem:[%s2 + $0x180] sm:$0xff]
        %v401 = vld [vmem:[%s2 + $0x188] sm:$0xff]
        %v402 = vld [vmem:[%s2 + $0x190] sm:$0xff]
        %v403 = vld [vmem:[%s2 + $0x198] sm:$0xff]
        %v404 = vld [vmem:[%s2 + $0x1a0] sm:$0xff]
        %v405 = vld [vmem:[%s2 + $0x1a8] sm:$0xff]
        %v406 = vld [vmem:[%s2 + $0x1b0] sm:$0xff]
        %v407 = vld [vmem:[%s2 + $0x1b8] sm:$0xff]
        %v408 = vld [vmem:[%s2 + $0x1c0] sm:$0xff]
        %v409 = vld [vmem:[%s2 + $0x1c8] sm:$0xff]
        %v410 = vld [vmem:[%s2 + $0x1d0] sm:$0xff]
        %v411 = vld [vmem:[%s2 + $0x1d8] sm:$0xff]
        %v412 = vld [vmem:[%s2 + $0x1e0] sm:$0xff]
        %v413 = vld [vmem:[%s2 + $0x1e8] sm:$0xff]
        %v414 = vld [vmem:[%s2 + $0x1f0] sm:$0xff]
        %v415 = vld [vmem:[%s2 + $0x1f8] sm:$0xff]
        %417 = vset.pattern.permute.xlu0 0
        %418 = vperm.xlu0 %417, %v352
        %v419 = vpop.permute.xlu0 %418
        %422 = vset.pattern.permute.xlu0 0
        %423 = vperm.xlu0 %422, %v353
        %v424 = vpop.permute.xlu0 %423
        %427 = vset.pattern.permute.xlu0 0
        %428 = vperm.xlu0 %427, %v354
        %v429 = vpop.permute.xlu0 %428
        %432 = vset.pattern.permute.xlu0 0
        %433 = vperm.xlu0 %432, %v355
        %v434 = vpop.permute.xlu0 %433
        %437 = vset.pattern.permute.xlu0 0
        %438 = vperm.xlu0 %437, %v356
        %v439 = vpop.permute.xlu0 %438
        %442 = vset.pattern.permute.xlu0 0
        %443 = vperm.xlu0 %442, %v357
        %v444 = vpop.permute.xlu0 %443
        %447 = vset.pattern.permute.xlu0 0
        %448 = vperm.xlu0 %447, %v358
        %v449 = vpop.permute.xlu0 %448
        %452 = vset.pattern.permute.xlu0 0
        %453 = vperm.xlu0 %452, %v359
        %v454 = vpop.permute.xlu0 %453
        %457 = vset.pattern.permute.xlu0 0
        %458 = vperm.xlu0 %457, %v360
        %v459 = vpop.permute.xlu0 %458
        %462 = vset.pattern.permute.xlu0 0
        %463 = vperm.xlu0 %462, %v361
        %v464 = vpop.permute.xlu0 %463
        %467 = vset.pattern.permute.xlu0 0
        %468 = vperm.xlu0 %467, %v362
        %v469 = vpop.permute.xlu0 %468
        %472 = vset.pattern.permute.xlu0 0
        %473 = vperm.xlu0 %472, %v363
        %v474 = vpop.permute.xlu0 %473
        %477 = vset.pattern.permute.xlu0 0
        %478 = vperm.xlu0 %477, %v364
        %v479 = vpop.permute.xlu0 %478
        %482 = vset.pattern.permute.xlu0 0
        %483 = vperm.xlu0 %482, %v365
        %v484 = vpop.permute.xlu0 %483
        %487 = vset.pattern.permute.xlu0 0
        %488 = vperm.xlu0 %487, %v366
        %v489 = vpop.permute.xlu0 %488
        %492 = vset.pattern.permute.xlu0 0
        %493 = vperm.xlu0 %492, %v367
        %v494 = vpop.permute.xlu0 %493
        %497 = vset.pattern.permute.xlu0 0
        %498 = vperm.xlu0 %497, %v368
        %v499 = vpop.permute.xlu0 %498
        %502 = vset.pattern.permute.xlu0 0
        %503 = vperm.xlu0 %502, %v369
        %v504 = vpop.permute.xlu0 %503
        %507 = vset.pattern.permute.xlu0 0
        %508 = vperm.xlu0 %507, %v370
        %v509 = vpop.permute.xlu0 %508
        %512 = vset.pattern.permute.xlu0 0
        %513 = vperm.xlu0 %512, %v371
        %v514 = vpop.permute.xlu0 %513
        %517 = vset.pattern.permute.xlu0 0
        %518 = vperm.xlu0 %517, %v372
        %v519 = vpop.permute.xlu0 %518
        %522 = vset.pattern.permute.xlu0 0
        %523 = vperm.xlu0 %522, %v373
        %v524 = vpop.permute.xlu0 %523
        %527 = vset.pattern.permute.xlu0 0
        %528 = vperm.xlu0 %527, %v374
        %v529 = vpop.permute.xlu0 %528
        %532 = vset.pattern.permute.xlu0 0
        %533 = vperm.xlu0 %532, %v375
        %v534 = vpop.permute.xlu0 %533
        %537 = vset.pattern.permute.xlu0 0
        %538 = vperm.xlu0 %537, %v376
        %v539 = vpop.permute.xlu0 %538
        %542 = vset.pattern.permute.xlu0 0
        %543 = vperm.xlu0 %542, %v377
        %v544 = vpop.permute.xlu0 %543
        %547 = vset.pattern.permute.xlu0 0
        %548 = vperm.xlu0 %547, %v378
        %v549 = vpop.permute.xlu0 %548
        %552 = vset.pattern.permute.xlu0 0
        %553 = vperm.xlu0 %552, %v379
        %v554 = vpop.permute.xlu0 %553
        %557 = vset.pattern.permute.xlu0 0
        %558 = vperm.xlu0 %557, %v380
        %v559 = vpop.permute.xlu0 %558
        %562 = vset.pattern.permute.xlu0 0
        %563 = vperm.xlu0 %562, %v381
        %v564 = vpop.permute.xlu0 %563
        %567 = vset.pattern.permute.xlu0 0
        %568 = vperm.xlu0 %567, %v382
        %v569 = vpop.permute.xlu0 %568
        %572 = vset.pattern.permute.xlu0 0
        %573 = vperm.xlu0 %572, %v383
        %v574 = vpop.permute.xlu0 %573
        %577 = vset.pattern.permute.xlu0 0
        %578 = vperm.xlu0 %577, %v384
        %v579 = vpop.permute.xlu0 %578
        %582 = vset.pattern.permute.xlu0 0
        %583 = vperm.xlu0 %582, %v385
        %v584 = vpop.permute.xlu0 %583
        %587 = vset.pattern.permute.xlu0 0
        %588 = vperm.xlu0 %587, %v386
        %v589 = vpop.permute.xlu0 %588
        %592 = vset.pattern.permute.xlu0 0
        %593 = vperm.xlu0 %592, %v387
        %v594 = vpop.permute.xlu0 %593
        %597 = vset.pattern.permute.xlu0 0
        %598 = vperm.xlu0 %597, %v388
        %v599 = vpop.permute.xlu0 %598
        %602 = vset.pattern.permute.xlu0 0
        %603 = vperm.xlu0 %602, %v389
        %v604 = vpop.permute.xlu0 %603
        %607 = vset.pattern.permute.xlu0 0
        %608 = vperm.xlu0 %607, %v390
        %v609 = vpop.permute.xlu0 %608
        %612 = vset.pattern.permute.xlu0 0
        %613 = vperm.xlu0 %612, %v391
        %v614 = vpop.permute.xlu0 %613
        %617 = vset.pattern.permute.xlu0 0
        %618 = vperm.xlu0 %617, %v392
        %v619 = vpop.permute.xlu0 %618
        %622 = vset.pattern.permute.xlu0 0
        %623 = vperm.xlu0 %622, %v393
        %v624 = vpop.permute.xlu0 %623
        %627 = vset.pattern.permute.xlu0 0
        %628 = vperm.xlu0 %627, %v394
        %v629 = vpop.permute.xlu0 %628
        %632 = vset.pattern.permute.xlu0 0
        %633 = vperm.xlu0 %632, %v395
        %v634 = vpop.permute.xlu0 %633
        %637 = vset.pattern.permute.xlu0 0
        %638 = vperm.xlu0 %637, %v396
        %v639 = vpop.permute.xlu0 %638
        %642 = vset.pattern.permute.xlu0 0
        %643 = vperm.xlu0 %642, %v397
        %v644 = vpop.permute.xlu0 %643
        %647 = vset.pattern.permute.xlu0 0
        %648 = vperm.xlu0 %647, %v398
        %v649 = vpop.permute.xlu0 %648
        %652 = vset.pattern.permute.xlu0 0
        %653 = vperm.xlu0 %652, %v399
        %v654 = vpop.permute.xlu0 %653
        %657 = vset.pattern.permute.xlu0 0
        %658 = vperm.xlu0 %657, %v400
        %v659 = vpop.permute.xlu0 %658
        %662 = vset.pattern.permute.xlu0 0
        %663 = vperm.xlu0 %662, %v401
        %v664 = vpop.permute.xlu0 %663
        %667 = vset.pattern.permute.xlu0 0
        %668 = vperm.xlu0 %667, %v402
        %v669 = vpop.permute.xlu0 %668
        %672 = vset.pattern.permute.xlu0 0
        %673 = vperm.xlu0 %672, %v403
        %v674 = vpop.permute.xlu0 %673
        %677 = vset.pattern.permute.xlu0 0
        %678 = vperm.xlu0 %677, %v404
        %v679 = vpop.permute.xlu0 %678
        %682 = vset.pattern.permute.xlu0 0
        %683 = vperm.xlu0 %682, %v405
        %v684 = vpop.permute.xlu0 %683
        %687 = vset.pattern.permute.xlu0 0
        %688 = vperm.xlu0 %687, %v406
        %v689 = vpop.permute.xlu0 %688
        %692 = vset.pattern.permute.xlu0 0
        %693 = vperm.xlu0 %692, %v407
        %v694 = vpop.permute.xlu0 %693
        %697 = vset.pattern.permute.xlu0 0
        %698 = vperm.xlu0 %697, %v408
        %v699 = vpop.permute.xlu0 %698
        %702 = vset.pattern.permute.xlu0 0
        %703 = vperm.xlu0 %702, %v409
        %v704 = vpop.permute.xlu0 %703
        %707 = vset.pattern.permute.xlu0 0
        %708 = vperm.xlu0 %707, %v410
        %v709 = vpop.permute.xlu0 %708
        %712 = vset.pattern.permute.xlu0 0
        %713 = vperm.xlu0 %712, %v411
        %v714 = vpop.permute.xlu0 %713
        %717 = vset.pattern.permute.xlu0 0
        %718 = vperm.xlu0 %717, %v412
        %v719 = vpop.permute.xlu0 %718
        %722 = vset.pattern.permute.xlu0 0
        %723 = vperm.xlu0 %722, %v413
        %v724 = vpop.permute.xlu0 %723
        %727 = vset.pattern.permute.xlu0 0
        %728 = vperm.xlu0 %727, %v414
        %v729 = vpop.permute.xlu0 %728
        %732 = vset.pattern.permute.xlu0 0
        %733 = vperm.xlu0 %732, %v415
        %v734 = vpop.permute.xlu0 %733
        %v800 = vunpack.c.l.b16 %v288
        %v801 = vunpack.c.l.b16 %v289
        %v802 = vunpack.c.l.b16 %v290
        %v803 = vunpack.c.l.b16 %v291
        %v804 = vunpack.c.l.b16 %v292
        %v805 = vunpack.c.l.b16 %v293
        %v806 = vunpack.c.l.b16 %v294
        %v807 = vunpack.c.l.b16 %v295
        %v808 = vunpack.c.l.b16 %v296
        %v809 = vunpack.c.l.b16 %v297
        %v810 = vunpack.c.l.b16 %v298
        %v811 = vunpack.c.l.b16 %v299
        %v812 = vunpack.c.l.b16 %v300
        %v813 = vunpack.c.l.b16 %v301
        %v814 = vunpack.c.l.b16 %v302
        %v815 = vunpack.c.l.b16 %v303
        %v816 = vunpack.c.l.b16 %v304
        %v817 = vunpack.c.l.b16 %v305
        %v818 = vunpack.c.l.b16 %v306
        %v819 = vunpack.c.l.b16 %v307
        %v820 = vunpack.c.l.b16 %v308
        %v821 = vunpack.c.l.b16 %v309
        %v822 = vunpack.c.l.b16 %v310
        %v823 = vunpack.c.l.b16 %v311
        %v824 = vunpack.c.l.b16 %v312
        %v825 = vunpack.c.l.b16 %v313
        %v826 = vunpack.c.l.b16 %v314
        %v827 = vunpack.c.l.b16 %v315
        %v828 = vunpack.c.l.b16 %v316
        %v829 = vunpack.c.l.b16 %v317
        %v830 = vunpack.c.l.b16 %v318
        %v831 = vunpack.c.l.b16 %v319
        %v832 = vunpack.c.l.b16 %v320
        %v833 = vunpack.c.l.b16 %v321
        %v834 = vunpack.c.l.b16 %v322
        %v835 = vunpack.c.l.b16 %v323
        %v836 = vunpack.c.l.b16 %v324
        %v837 = vunpack.c.l.b16 %v325
        %v838 = vunpack.c.l.b16 %v326
        %v839 = vunpack.c.l.b16 %v327
        %v840 = vunpack.c.l.b16 %v328
        %v841 = vunpack.c.l.b16 %v329
        %v842 = vunpack.c.l.b16 %v330
        %v843 = vunpack.c.l.b16 %v331
        %v844 = vunpack.c.l.b16 %v332
        %v845 = vunpack.c.l.b16 %v333
        %v846 = vunpack.c.l.b16 %v334
        %v847 = vunpack.c.l.b16 %v335
        %v848 = vunpack.c.l.b16 %v336
        %v849 = vunpack.c.l.b16 %v337
        %v850 = vunpack.c.l.b16 %v338
        %v851 = vunpack.c.l.b16 %v339
        %v852 = vunpack.c.l.b16 %v340
        %v853 = vunpack.c.l.b16 %v341
        %v854 = vunpack.c.l.b16 %v342
        %v855 = vunpack.c.l.b16 %v343
        %v856 = vunpack.c.l.b16 %v344
        %v857 = vunpack.c.l.b16 %v345
        %v858 = vunpack.c.l.b16 %v346
        %v859 = vunpack.c.l.b16 %v347
        %v860 = vunpack.c.l.b16 %v348
        %v861 = vunpack.c.l.b16 %v349
        %v862 = vunpack.c.l.b16 %v350
        %v863 = vunpack.c.l.b16 %v351
        %v864 = vpack.c.b16 %v801, %v800
        %v865 = vpack.c.b16 %v803, %v802
        %v866 = vpack.c.b16 %v805, %v804
        %v867 = vpack.c.b16 %v807, %v806
        %v868 = vpack.c.b16 %v809, %v808
        %v869 = vpack.c.b16 %v811, %v810
        %v870 = vpack.c.b16 %v813, %v812
        %v871 = vpack.c.b16 %v815, %v814
        %v872 = vpack.c.b16 %v817, %v816
        %v873 = vpack.c.b16 %v819, %v818
        %v874 = vpack.c.b16 %v821, %v820
        %v875 = vpack.c.b16 %v823, %v822
        %v876 = vpack.c.b16 %v825, %v824
        %v877 = vpack.c.b16 %v827, %v826
        %v878 = vpack.c.b16 %v829, %v828
        %v879 = vpack.c.b16 %v831, %v830
        %v880 = vpack.c.b16 %v833, %v832
        %v881 = vpack.c.b16 %v835, %v834
        %v882 = vpack.c.b16 %v837, %v836
        %v883 = vpack.c.b16 %v839, %v838
        %v884 = vpack.c.b16 %v841, %v840
        %v885 = vpack.c.b16 %v843, %v842
        %v886 = vpack.c.b16 %v845, %v844
        %v887 = vpack.c.b16 %v847, %v846
        %v888 = vpack.c.b16 %v849, %v848
        %v889 = vpack.c.b16 %v851, %v850
        %v890 = vpack.c.b16 %v853, %v852
        %v891 = vpack.c.b16 %v855, %v854
        %v892 = vpack.c.b16 %v857, %v856
        %v893 = vpack.c.b16 %v859, %v858
        %v894 = vpack.c.b16 %v861, %v860
        %v895 = vpack.c.b16 %v863, %v862
        %928 = vmatprep.subr.bf16.mxu0 0
        %929 = vmatpush1.bf16.msra.mxu0 %v287
        %930 = vmatprep.subr.bf16.mxu0 0
        %931 = vmatpush1.bf16.msra.mxu0 %v286
        %932 = vmatprep.subr.bf16.mxu0 0
        %933 = vmatpush1.bf16.msra.mxu0 %v285
        %934 = vmatprep.subr.bf16.mxu0 0
        %935 = vmatpush1.bf16.msra.mxu0 %v284
        %936 = vmatprep.subr.bf16.mxu0 0
        %937 = vmatpush1.bf16.msra.mxu0 %v283
        %938 = vmatprep.subr.bf16.mxu0 0
        %939 = vmatpush1.bf16.msra.mxu0 %v282
        %940 = vmatprep.subr.bf16.mxu0 0
        %941 = vmatpush1.bf16.msra.mxu0 %v281
        %942 = vmatprep.subr.bf16.mxu0 0
        %943 = vmatpush1.bf16.msra.mxu0 %v280
        %944 = vmatprep.subr.bf16.mxu0 0
        %945 = vmatpush2.bf16.msra.mxu0 0
        %946 = vmatprep.subr.bf16.mxu0 0
        %947 = vmatpush2.bf16.msra.mxu0 0
        %948 = vmatprep.subr.bf16.mxu0 0
        %949 = vmatpush2.bf16.msra.mxu0 0
        %950 = vmatprep.subr.bf16.mxu0 0
        %951 = vmatpush2.bf16.msra.mxu0 0
        %952 = vmatprep.subr.bf16.mxu0 0
        %953 = vmatpush2.bf16.msra.mxu0 0
        %954 = vmatprep.subr.bf16.mxu0 0
        %955 = vmatpush2.bf16.msra.mxu0 0
        %956 = vmatprep.subr.bf16.mxu0 0
        %957 = vmatpush2.bf16.msra.mxu0 0
        %958 = vmatprep.subr.bf16.mxu0 0
        %959 = vmatpush2.bf16.msra.mxu0 0
        %960 = vmatprep.mubr.bf16.mxu0 0
        %961 = vmatmul.mubr.bf16.gmra.mxu0 %v864
        %v962 = vpop.f32.mrf.mxu0
        %v963 = vadd.f32 %v419, %v962
        %v964 = vpop.f32.mrf.mxu0
        %v965 = vpop.f32.mrf.mxu0
        %v966 = vadd.f32 %v424, %v965
        %v967 = vpop.f32.mrf.mxu0
        %968 = vmatprep.mubr.bf16.mxu0 0
        %969 = vmatmul.mubr.bf16.gmra.mxu0 %v865
        %v970 = vpop.f32.mrf.mxu0
        %v971 = vadd.f32 %v429, %v970
        %v972 = vpop.f32.mrf.mxu0
        %v973 = vpop.f32.mrf.mxu0
        %v974 = vadd.f32 %v434, %v973
        %v975 = vpop.f32.mrf.mxu0
        %976 = vmatprep.mubr.bf16.mxu0 0
        %977 = vmatmul.mubr.bf16.gmra.mxu0 %v866
        %v978 = vpop.f32.mrf.mxu0
        %v979 = vadd.f32 %v439, %v978
        %v980 = vpop.f32.mrf.mxu0
        %v981 = vpop.f32.mrf.mxu0
        %v982 = vadd.f32 %v444, %v981
        %v983 = vpop.f32.mrf.mxu0
        %984 = vmatprep.mubr.bf16.mxu0 0
        %985 = vmatmul.mubr.bf16.gmra.mxu0 %v867
        %v986 = vpop.f32.mrf.mxu0
        %v987 = vadd.f32 %v449, %v986
        %v988 = vpop.f32.mrf.mxu0
        %v989 = vpop.f32.mrf.mxu0
        %v990 = vadd.f32 %v454, %v989
        %v991 = vpop.f32.mrf.mxu0
        %992 = vmatprep.mubr.bf16.mxu0 0
        %993 = vmatmul.mubr.bf16.gmra.mxu0 %v868
        %v994 = vpop.f32.mrf.mxu0
        %v995 = vadd.f32 %v459, %v994
        %v996 = vpop.f32.mrf.mxu0
        %v997 = vpop.f32.mrf.mxu0
        %v998 = vadd.f32 %v464, %v997
        %v999 = vpop.f32.mrf.mxu0
        %1000 = vmatprep.mubr.bf16.mxu0 0
        %1001 = vmatmul.mubr.bf16.gmra.mxu0 %v869
        %v1002 = vpop.f32.mrf.mxu0
        %v1003 = vadd.f32 %v469, %v1002
        %v1004 = vpop.f32.mrf.mxu0
        %v1005 = vpop.f32.mrf.mxu0
        %v1006 = vadd.f32 %v474, %v1005
        %v1007 = vpop.f32.mrf.mxu0
        %1008 = vmatprep.mubr.bf16.mxu0 0
        %1009 = vmatmul.mubr.bf16.gmra.mxu0 %v870
        %v1010 = vpop.f32.mrf.mxu0
        %v1011 = vadd.f32 %v479, %v1010
        %v1012 = vpop.f32.mrf.mxu0
        %v1013 = vpop.f32.mrf.mxu0
        %v1014 = vadd.f32 %v484, %v1013
        %v1015 = vpop.f32.mrf.mxu0
        %1016 = vmatprep.mubr.bf16.mxu0 0
        %1017 = vmatmul.mubr.bf16.gmra.mxu0 %v871
        %v1018 = vpop.f32.mrf.mxu0
        %v1019 = vadd.f32 %v489, %v1018
        %v1020 = vpop.f32.mrf.mxu0
        %v1021 = vpop.f32.mrf.mxu0
        %v1022 = vadd.f32 %v494, %v1021
        %v1023 = vpop.f32.mrf.mxu0
        %1024 = vmatprep.mubr.bf16.mxu0 0
        %1025 = vmatmul.mubr.bf16.gmra.mxu0 %v872
        %v1026 = vpop.f32.mrf.mxu0
        %v1027 = vadd.f32 %v499, %v1026
        %v1028 = vpop.f32.mrf.mxu0
        %v1029 = vpop.f32.mrf.mxu0
        %v1030 = vadd.f32 %v504, %v1029
        %v1031 = vpop.f32.mrf.mxu0
        %1032 = vmatprep.mubr.bf16.mxu0 0
        %1033 = vmatmul.mubr.bf16.gmra.mxu0 %v873
        %v1034 = vpop.f32.mrf.mxu0
        %v1035 = vadd.f32 %v509, %v1034
        %v1036 = vpop.f32.mrf.mxu0
        %v1037 = vpop.f32.mrf.mxu0
        %v1038 = vadd.f32 %v514, %v1037
        %v1039 = vpop.f32.mrf.mxu0
        %1040 = vmatprep.mubr.bf16.mxu0 0
        %1041 = vmatmul.mubr.bf16.gmra.mxu0 %v874
        %v1042 = vpop.f32.mrf.mxu0
        %v1043 = vadd.f32 %v519, %v1042
        %v1044 = vpop.f32.mrf.mxu0
        %v1045 = vpop.f32.mrf.mxu0
        %v1046 = vadd.f32 %v524, %v1045
        %v1047 = vpop.f32.mrf.mxu0
        %1048 = vmatprep.mubr.bf16.mxu0 0
        %1049 = vmatmul.mubr.bf16.gmra.mxu0 %v875
        %v1050 = vpop.f32.mrf.mxu0
        %v1051 = vadd.f32 %v529, %v1050
        %v1052 = vpop.f32.mrf.mxu0
        %v1053 = vpop.f32.mrf.mxu0
        %v1054 = vadd.f32 %v534, %v1053
        %v1055 = vpop.f32.mrf.mxu0
        %1056 = vmatprep.mubr.bf16.mxu0 0
        %1057 = vmatmul.mubr.bf16.gmra.mxu0 %v876
        %v1058 = vpop.f32.mrf.mxu0
        %v1059 = vadd.f32 %v539, %v1058
        %v1060 = vpop.f32.mrf.mxu0
        %v1061 = vpop.f32.mrf.mxu0
        %v1062 = vadd.f32 %v544, %v1061
        %v1063 = vpop.f32.mrf.mxu0
        %1064 = vmatprep.mubr.bf16.mxu0 0
        %1065 = vmatmul.mubr.bf16.gmra.mxu0 %v877
        %v1066 = vpop.f32.mrf.mxu0
        %v1067 = vadd.f32 %v549, %v1066
        %v1068 = vpop.f32.mrf.mxu0
        %v1069 = vpop.f32.mrf.mxu0
        %v1070 = vadd.f32 %v554, %v1069
        %v1071 = vpop.f32.mrf.mxu0
        %1072 = vmatprep.mubr.bf16.mxu0 0
        %1073 = vmatmul.mubr.bf16.gmra.mxu0 %v878
        %v1074 = vpop.f32.mrf.mxu0
        %v1075 = vadd.f32 %v559, %v1074
        %v1076 = vpop.f32.mrf.mxu0
        %v1077 = vpop.f32.mrf.mxu0
        %v1078 = vadd.f32 %v564, %v1077
        %v1079 = vpop.f32.mrf.mxu0
        %1080 = vmatprep.mubr.bf16.mxu0 0
        %1081 = vmatmul.mubr.bf16.gmra.mxu0 %v879
        %v1082 = vpop.f32.mrf.mxu0
        %v1083 = vadd.f32 %v569, %v1082
        %v1084 = vpop.f32.mrf.mxu0
        %v1085 = vpop.f32.mrf.mxu0
        %v1086 = vadd.f32 %v574, %v1085
        %v1087 = vpop.f32.mrf.mxu0
        %1088 = vmatprep.mubr.bf16.mxu0 0
        %1089 = vmatmul.mubr.bf16.gmra.mxu0 %v880
        %v1090 = vpop.f32.mrf.mxu0
        %v1091 = vadd.f32 %v579, %v1090
        %v1092 = vpop.f32.mrf.mxu0
        %v1093 = vpop.f32.mrf.mxu0
        %v1094 = vadd.f32 %v584, %v1093
        %v1095 = vpop.f32.mrf.mxu0
        %1096 = vmatprep.mubr.bf16.mxu0 0
        %1097 = vmatmul.mubr.bf16.gmra.mxu0 %v881
        %v1098 = vpop.f32.mrf.mxu0
        %v1099 = vadd.f32 %v589, %v1098
        %v1100 = vpop.f32.mrf.mxu0
        %v1101 = vpop.f32.mrf.mxu0
        %v1102 = vadd.f32 %v594, %v1101
        %v1103 = vpop.f32.mrf.mxu0
        %1104 = vmatprep.mubr.bf16.mxu0 0
        %1105 = vmatmul.mubr.bf16.gmra.mxu0 %v882
        %v1106 = vpop.f32.mrf.mxu0
        %v1107 = vadd.f32 %v599, %v1106
        %v1108 = vpop.f32.mrf.mxu0
        %v1109 = vpop.f32.mrf.mxu0
        %v1110 = vadd.f32 %v604, %v1109
        %v1111 = vpop.f32.mrf.mxu0
        %1112 = vmatprep.mubr.bf16.mxu0 0
        %1113 = vmatmul.mubr.bf16.gmra.mxu0 %v883
        %v1114 = vpop.f32.mrf.mxu0
        %v1115 = vadd.f32 %v609, %v1114
        %v1116 = vpop.f32.mrf.mxu0
        %v1117 = vpop.f32.mrf.mxu0
        %v1118 = vadd.f32 %v614, %v1117
        %v1119 = vpop.f32.mrf.mxu0
        %1120 = vmatprep.mubr.bf16.mxu0 0
        %1121 = vmatmul.mubr.bf16.gmra.mxu0 %v884
        %v1122 = vpop.f32.mrf.mxu0
        %v1123 = vadd.f32 %v619, %v1122
        %v1124 = vpop.f32.mrf.mxu0
        %v1125 = vpop.f32.mrf.mxu0
        %v1126 = vadd.f32 %v624, %v1125
        %v1127 = vpop.f32.mrf.mxu0
        %1128 = vmatprep.mubr.bf16.mxu0 0
        %1129 = vmatmul.mubr.bf16.gmra.mxu0 %v885
        %v1130 = vpop.f32.mrf.mxu0
        %v1131 = vadd.f32 %v629, %v1130
        %v1132 = vpop.f32.mrf.mxu0
        %v1133 = vpop.f32.mrf.mxu0
        %v1134 = vadd.f32 %v634, %v1133
        %v1135 = vpop.f32.mrf.mxu0
        %1136 = vmatprep.mubr.bf16.mxu0 0
        %1137 = vmatmul.mubr.bf16.gmra.mxu0 %v886
        %v1138 = vpop.f32.mrf.mxu0
        %v1139 = vadd.f32 %v639, %v1138
        %v1140 = vpop.f32.mrf.mxu0
        %v1141 = vpop.f32.mrf.mxu0
        %v1142 = vadd.f32 %v644, %v1141
        %v1143 = vpop.f32.mrf.mxu0
        %1144 = vmatprep.mubr.bf16.mxu0 0
        %1145 = vmatmul.mubr.bf16.gmra.mxu0 %v887
        %v1146 = vpop.f32.mrf.mxu0
        %v1147 = vadd.f32 %v649, %v1146
        %v1148 = vpop.f32.mrf.mxu0
        %v1149 = vpop.f32.mrf.mxu0
        %v1150 = vadd.f32 %v654, %v1149
        %v1151 = vpop.f32.mrf.mxu0
        %1152 = vmatprep.mubr.bf16.mxu0 0
        %1153 = vmatmul.mubr.bf16.gmra.mxu0 %v888
        %v1154 = vpop.f32.mrf.mxu0
        %v1155 = vadd.f32 %v659, %v1154
        %v1156 = vpop.f32.mrf.mxu0
        %v1157 = vpop.f32.mrf.mxu0
        %v1158 = vadd.f32 %v664, %v1157
        %v1159 = vpop.f32.mrf.mxu0
        %1160 = vmatprep.mubr.bf16.mxu0 0
        %1161 = vmatmul.mubr.bf16.gmra.mxu0 %v889
        %v1162 = vpop.f32.mrf.mxu0
        %v1163 = vadd.f32 %v669, %v1162
        %v1164 = vpop.f32.mrf.mxu0
        %v1165 = vpop.f32.mrf.mxu0
        %v1166 = vadd.f32 %v674, %v1165
        %v1167 = vpop.f32.mrf.mxu0
        %1168 = vmatprep.mubr.bf16.mxu0 0
        %1169 = vmatmul.mubr.bf16.gmra.mxu0 %v890
        %v1170 = vpop.f32.mrf.mxu0
        %v1171 = vadd.f32 %v679, %v1170
        %v1172 = vpop.f32.mrf.mxu0
        %v1173 = vpop.f32.mrf.mxu0
        %v1174 = vadd.f32 %v684, %v1173
        %v1175 = vpop.f32.mrf.mxu0
        %1176 = vmatprep.mubr.bf16.mxu0 0
        %1177 = vmatmul.mubr.bf16.gmra.mxu0 %v891
        %v1178 = vpop.f32.mrf.mxu0
        %v1179 = vadd.f32 %v689, %v1178
        %v1180 = vpop.f32.mrf.mxu0
        %v1181 = vpop.f32.mrf.mxu0
        %v1182 = vadd.f32 %v694, %v1181
        %v1183 = vpop.f32.mrf.mxu0
        %1184 = vmatprep.mubr.bf16.mxu0 0
        %1185 = vmatmul.mubr.bf16.gmra.mxu0 %v892
        %v1186 = vpop.f32.mrf.mxu0
        %v1187 = vadd.f32 %v699, %v1186
        %v1188 = vpop.f32.mrf.mxu0
        %v1189 = vpop.f32.mrf.mxu0
        %v1190 = vadd.f32 %v704, %v1189
        %v1191 = vpop.f32.mrf.mxu0
        %1192 = vmatprep.mubr.bf16.mxu0 0
        %1193 = vmatmul.mubr.bf16.gmra.mxu0 %v893
        %v1194 = vpop.f32.mrf.mxu0
        %v1195 = vadd.f32 %v709, %v1194
        %v1196 = vpop.f32.mrf.mxu0
        %v1197 = vpop.f32.mrf.mxu0
        %v1198 = vadd.f32 %v714, %v1197
        %v1199 = vpop.f32.mrf.mxu0
        %1200 = vmatprep.mubr.bf16.mxu0 0
        %1201 = vmatmul.mubr.bf16.gmra.mxu0 %v894
        %v1202 = vpop.f32.mrf.mxu0
        %v1203 = vadd.f32 %v719, %v1202
        %v1204 = vpop.f32.mrf.mxu0
        %v1205 = vpop.f32.mrf.mxu0
        %v1206 = vadd.f32 %v724, %v1205
        %v1207 = vpop.f32.mrf.mxu0
        %1208 = vmatprep.mubr.bf16.mxu0 0
        %1209 = vmatmul.mubr.bf16.gmra.mxu0 %v895
        %v1210 = vpop.f32.mrf.mxu0
        %v1211 = vadd.f32 %v729, %v1210
        %v1212 = vpop.f32.mrf.mxu0
        %v1213 = vpop.f32.mrf.mxu0
        %v1214 = vadd.f32 %v734, %v1213
        %v1215 = vpop.f32.mrf.mxu0
        %1216 = vdwg.mxu0
        %v1217 = vmul.f32 %v963, %v963
        %v1218 = vmul.f32 %v966, %v966
        %v1219 = vmul.f32 %v971, %v971
        %v1220 = vmul.f32 %v974, %v974
        %v1221 = vmul.f32 %v979, %v979
        %v1222 = vmul.f32 %v982, %v982
        %v1223 = vmul.f32 %v987, %v987
        %v1224 = vmul.f32 %v990, %v990
        %v1225 = vmul.f32 %v995, %v995
        %v1226 = vmul.f32 %v998, %v998
        %v1227 = vmul.f32 %v1003, %v1003
        %v1228 = vmul.f32 %v1006, %v1006
        %v1229 = vmul.f32 %v1011, %v1011
        %v1230 = vmul.f32 %v1014, %v1014
        %v1231 = vmul.f32 %v1019, %v1019
        %v1232 = vmul.f32 %v1022, %v1022
        %v1233 = vmul.f32 %v1027, %v1027
        %v1234 = vmul.f32 %v1030, %v1030
        %v1235 = vmul.f32 %v1035, %v1035
        %v1236 = vmul.f32 %v1038, %v1038
        %v1237 = vmul.f32 %v1043, %v1043
        %v1238 = vmul.f32 %v1046, %v1046
        %v1239 = vmul.f32 %v1051, %v1051
        %v1240 = vmul.f32 %v1054, %v1054
        %v1241 = vmul.f32 %v1059, %v1059
        %v1242 = vmul.f32 %v1062, %v1062
        %v1243 = vmul.f32 %v1067, %v1067
        %v1244 = vmul.f32 %v1070, %v1070
        %v1245 = vmul.f32 %v1075, %v1075
        %v1246 = vmul.f32 %v1078, %v1078
        %v1247 = vmul.f32 %v1083, %v1083
        %v1248 = vmul.f32 %v1086, %v1086
        %v1249 = vmul.f32 %v1091, %v1091
        %v1250 = vmul.f32 %v1094, %v1094
        %v1251 = vmul.f32 %v1099, %v1099
        %v1252 = vmul.f32 %v1102, %v1102
        %v1253 = vmul.f32 %v1107, %v1107
        %v1254 = vmul.f32 %v1110, %v1110
        %v1255 = vmul.f32 %v1115, %v1115
        %v1256 = vmul.f32 %v1118, %v1118
        %v1257 = vmul.f32 %v1123, %v1123
        %v1258 = vmul.f32 %v1126, %v1126
        %v1259 = vmul.f32 %v1131, %v1131
        %v1260 = vmul.f32 %v1134, %v1134
        %v1261 = vmul.f32 %v1139, %v1139
        %v1262 = vmul.f32 %v1142, %v1142
        %v1263 = vmul.f32 %v1147, %v1147
        %v1264 = vmul.f32 %v1150, %v1150
        %v1265 = vmul.f32 %v1155, %v1155
        %v1266 = vmul.f32 %v1158, %v1158
        %v1267 = vmul.f32 %v1163, %v1163
        %v1268 = vmul.f32 %v1166, %v1166
        %v1269 = vmul.f32 %v1171, %v1171
        %v1270 = vmul.f32 %v1174, %v1174
        %v1271 = vmul.f32 %v1179, %v1179
        %v1272 = vmul.f32 %v1182, %v1182
        %v1273 = vmul.f32 %v1187, %v1187
        %v1274 = vmul.f32 %v1190, %v1190
        %v1275 = vmul.f32 %v1195, %v1195
        %v1276 = vmul.f32 %v1198, %v1198
        %v1277 = vmul.f32 %v1203, %v1203
        %v1278 = vmul.f32 %v1206, %v1206
        %v1279 = vmul.f32 %v1211, %v1211
        %v1280 = vmul.f32 %v1214, %v1214
        %v1281 = vmul.f32 %v1217, %v963
        %v1282 = vmul.f32 %v1218, %v966
        %v1283 = vmul.f32 %v1219, %v971
        %v1284 = vmul.f32 %v1220, %v974
        %v1285 = vmul.f32 %v1221, %v979
        %v1286 = vmul.f32 %v1222, %v982
        %v1287 = vmul.f32 %v1223, %v987
        %v1288 = vmul.f32 %v1224, %v990
        %v1289 = vmul.f32 %v1225, %v995
        %v1290 = vmul.f32 %v1226, %v998
        %v1291 = vmul.f32 %v1227, %v1003
        %v1292 = vmul.f32 %v1228, %v1006
        %v1293 = vmul.f32 %v1229, %v1011
        %v1294 = vmul.f32 %v1230, %v1014
        %v1295 = vmul.f32 %v1231, %v1019
        %v1296 = vmul.f32 %v1232, %v1022
        %v1297 = vmul.f32 %v1233, %v1027
        %v1298 = vmul.f32 %v1234, %v1030
        %v1299 = vmul.f32 %v1235, %v1035
        %v1300 = vmul.f32 %v1236, %v1038
        %v1301 = vmul.f32 %v1237, %v1043
        %v1302 = vmul.f32 %v1238, %v1046
        %v1303 = vmul.f32 %v1239, %v1051
        %v1304 = vmul.f32 %v1240, %v1054
        %v1305 = vmul.f32 %v1241, %v1059
        %v1306 = vmul.f32 %v1242, %v1062
        %v1307 = vmul.f32 %v1243, %v1067
        %v1308 = vmul.f32 %v1244, %v1070
        %v1309 = vmul.f32 %v1245, %v1075
        %v1310 = vmul.f32 %v1246, %v1078
        %v1311 = vmul.f32 %v1247, %v1083
        %v1312 = vmul.f32 %v1248, %v1086
        %v1313 = vmul.f32 %v1249, %v1091
        %v1314 = vmul.f32 %v1250, %v1094
        %v1315 = vmul.f32 %v1251, %v1099
        %v1316 = vmul.f32 %v1252, %v1102
        %v1317 = vmul.f32 %v1253, %v1107
        %v1318 = vmul.f32 %v1254, %v1110
        %v1319 = vmul.f32 %v1255, %v1115
        %v1320 = vmul.f32 %v1256, %v1118
        %v1321 = vmul.f32 %v1257, %v1123
        %v1322 = vmul.f32 %v1258, %v1126
        %v1323 = vmul.f32 %v1259, %v1131
        %v1324 = vmul.f32 %v1260, %v1134
        %v1325 = vmul.f32 %v1261, %v1139
        %v1326 = vmul.f32 %v1262, %v1142
        %v1327 = vmul.f32 %v1263, %v1147
        %v1328 = vmul.f32 %v1264, %v1150
        %v1329 = vmul.f32 %v1265, %v1155
        %v1330 = vmul.f32 %v1266, %v1158
        %v1331 = vmul.f32 %v1267, %v1163
        %v1332 = vmul.f32 %v1268, %v1166
        %v1333 = vmul.f32 %v1269, %v1171
        %v1334 = vmul.f32 %v1270, %v1174
        %v1335 = vmul.f32 %v1271, %v1179
        %v1336 = vmul.f32 %v1272, %v1182
        %v1337 = vmul.f32 %v1273, %v1187
        %v1338 = vmul.f32 %v1274, %v1190
        %v1339 = vmul.f32 %v1275, %v1195
        %v1340 = vmul.f32 %v1276, %v1198
        %v1341 = vmul.f32 %v1277, %v1203
        %v1342 = vmul.f32 %v1278, %v1206
        %v1343 = vmul.f32 %v1279, %v1211
        %v1344 = vmul.f32 %v1280, %v1214
        %v1345 = vmul.f32 %v1281, 0.044715
        %v1346 = vmul.f32 %v1282, 0.044715
        %v1347 = vmul.f32 %v1283, 0.044715
        %v1348 = vmul.f32 %v1284, 0.044715
        %v1349 = vmul.f32 %v1285, 0.044715
        %v1350 = vmul.f32 %v1286, 0.044715
        %v1351 = vmul.f32 %v1287, 0.044715
        %v1352 = vmul.f32 %v1288, 0.044715
        %v1353 = vmul.f32 %v1289, 0.044715
        %v1354 = vmul.f32 %v1290, 0.044715
        %v1355 = vmul.f32 %v1291, 0.044715
        %v1356 = vmul.f32 %v1292, 0.044715
        %v1357 = vmul.f32 %v1293, 0.044715
        %v1358 = vmul.f32 %v1294, 0.044715
        %v1359 = vmul.f32 %v1295, 0.044715
        %v1360 = vmul.f32 %v1296, 0.044715
        %v1361 = vmul.f32 %v1297, 0.044715
        %v1362 = vmul.f32 %v1298, 0.044715
        %v1363 = vmul.f32 %v1299, 0.044715
        %v1364 = vmul.f32 %v1300, 0.044715
        %v1365 = vmul.f32 %v1301, 0.044715
        %v1366 = vmul.f32 %v1302, 0.044715
        %v1367 = vmul.f32 %v1303, 0.044715
        %v1368 = vmul.f32 %v1304, 0.044715
        %v1369 = vmul.f32 %v1305, 0.044715
        %v1370 = vmul.f32 %v1306, 0.044715
        %v1371 = vmul.f32 %v1307, 0.044715
        %v1372 = vmul.f32 %v1308, 0.044715
        %v1373 = vmul.f32 %v1309, 0.044715
        %v1374 = vmul.f32 %v1310, 0.044715
        %v1375 = vmul.f32 %v1311, 0.044715
        %v1376 = vmul.f32 %v1312, 0.044715
        %v1377 = vmul.f32 %v1313, 0.044715
        %v1378 = vmul.f32 %v1314, 0.044715
        %v1379 = vmul.f32 %v1315, 0.044715
        %v1380 = vmul.f32 %v1316, 0.044715
        %v1381 = vmul.f32 %v1317, 0.044715
        %v1382 = vmul.f32 %v1318, 0.044715
        %v1383 = vmul.f32 %v1319, 0.044715
        %v1384 = vmul.f32 %v1320, 0.044715
        %v1385 = vmul.f32 %v1321, 0.044715
        %v1386 = vmul.f32 %v1322, 0.044715
        %v1387 = vmul.f32 %v1323, 0.044715
        %v1388 = vmul.f32 %v1324, 0.044715
        %v1389 = vmul.f32 %v1325, 0.044715
        %v1390 = vmul.f32 %v1326, 0.044715
        %v1391 = vmul.f32 %v1327, 0.044715
        %v1392 = vmul.f32 %v1328, 0.044715
        %v1393 = vmul.f32 %v1329, 0.044715
        %v1394 = vmul.f32 %v1330, 0.044715
        %v1395 = vmul.f32 %v1331, 0.044715
        %v1396 = vmul.f32 %v1332, 0.044715
        %v1397 = vmul.f32 %v1333, 0.044715
        %v1398 = vmul.f32 %v1334, 0.044715
        %v1399 = vmul.f32 %v1335, 0.044715
        %v1400 = vmul.f32 %v1336, 0.044715
        %v1401 = vmul.f32 %v1337, 0.044715
        %v1402 = vmul.f32 %v1338, 0.044715
        %v1403 = vmul.f32 %v1339, 0.044715
        %v1404 = vmul.f32 %v1340, 0.044715
        %v1405 = vmul.f32 %v1341, 0.044715
        %v1406 = vmul.f32 %v1342, 0.044715
        %v1407 = vmul.f32 %v1343, 0.044715
        %v1408 = vmul.f32 %v1344, 0.044715
        %v1409 = vadd.f32 %v963, %v1345
        %v1410 = vadd.f32 %v966, %v1346
        %v1411 = vadd.f32 %v971, %v1347
        %v1412 = vadd.f32 %v974, %v1348
        %v1413 = vadd.f32 %v979, %v1349
        %v1414 = vadd.f32 %v982, %v1350
        %v1415 = vadd.f32 %v987, %v1351
        %v1416 = vadd.f32 %v990, %v1352
        %v1417 = vadd.f32 %v995, %v1353
        %v1418 = vadd.f32 %v998, %v1354
        %v1419 = vadd.f32 %v1003, %v1355
        %v1420 = vadd.f32 %v1006, %v1356
        %v1421 = vadd.f32 %v1011, %v1357
        %v1422 = vadd.f32 %v1014, %v1358
        %v1423 = vadd.f32 %v1019, %v1359
        %v1424 = vadd.f32 %v1022, %v1360
        %v1425 = vadd.f32 %v1027, %v1361
        %v1426 = vadd.f32 %v1030, %v1362
        %v1427 = vadd.f32 %v1035, %v1363
        %v1428 = vadd.f32 %v1038, %v1364
        %v1429 = vadd.f32 %v1043, %v1365
        %v1430 = vadd.f32 %v1046, %v1366
        %v1431 = vadd.f32 %v1051, %v1367
        %v1432 = vadd.f32 %v1054, %v1368
        %v1433 = vadd.f32 %v1059, %v1369
        %v1434 = vadd.f32 %v1062, %v1370
        %v1435 = vadd.f32 %v1067, %v1371
        %v1436 = vadd.f32 %v1070, %v1372
        %v1437 = vadd.f32 %v1075, %v1373
        %v1438 = vadd.f32 %v1078, %v1374
        %v1439 = vadd.f32 %v1083, %v1375
        %v1440 = vadd.f32 %v1086, %v1376
        %v1441 = vadd.f32 %v1091, %v1377
        %v1442 = vadd.f32 %v1094, %v1378
        %v1443 = vadd.f32 %v1099, %v1379
        %v1444 = vadd.f32 %v1102, %v1380
        %v1445 = vadd.f32 %v1107, %v1381
        %v1446 = vadd.f32 %v1110, %v1382
        %v1447 = vadd.f32 %v1115, %v1383
        %v1448 = vadd.f32 %v1118, %v1384
        %v1449 = vadd.f32 %v1123, %v1385
        %v1450 = vadd.f32 %v1126, %v1386
        %v1451 = vadd.f32 %v1131, %v1387
        %v1452 = vadd.f32 %v1134, %v1388
        %v1453 = vadd.f32 %v1139, %v1389
        %v1454 = vadd.f32 %v1142, %v1390
        %v1455 = vadd.f32 %v1147, %v1391
        %v1456 = vadd.f32 %v1150, %v1392
        %v1457 = vadd.f32 %v1155, %v1393
        %v1458 = vadd.f32 %v1158, %v1394
        %v1459 = vadd.f32 %v1163, %v1395
        %v1460 = vadd.f32 %v1166, %v1396
        %v1461 = vadd.f32 %v1171, %v1397
        %v1462 = vadd.f32 %v1174, %v1398
        %v1463 = vadd.f32 %v1179, %v1399
        %v1464 = vadd.f32 %v1182, %v1400
        %v1465 = vadd.f32 %v1187, %v1401
        %v1466 = vadd.f32 %v1190, %v1402
        %v1467 = vadd.f32 %v1195, %v1403
        %v1468 = vadd.f32 %v1198, %v1404
        %v1469 = vadd.f32 %v1203, %v1405
        %v1470 = vadd.f32 %v1206, %v1406
        %v1471 = vadd.f32 %v1211, %v1407
        %v1472 = vadd.f32 %v1214, %v1408
        %v1473 = vmul.f32 %v1409, 0.7978846
        %v1474 = vmul.f32 %v1410, 0.7978846
        %v1475 = vmul.f32 %v1411, 0.7978846
        %v1476 = vmul.f32 %v1412, 0.7978846
        %v1477 = vmul.f32 %v1413, 0.7978846
        %v1478 = vmul.f32 %v1414, 0.7978846
        %v1479 = vmul.f32 %v1415, 0.7978846
        %v1480 = vmul.f32 %v1416, 0.7978846
        %v1481 = vmul.f32 %v1417, 0.7978846
        %v1482 = vmul.f32 %v1418, 0.7978846
        %v1483 = vmul.f32 %v1419, 0.7978846
        %v1484 = vmul.f32 %v1420, 0.7978846
        %v1485 = vmul.f32 %v1421, 0.7978846
        %v1486 = vmul.f32 %v1422, 0.7978846
        %v1487 = vmul.f32 %v1423, 0.7978846
        %v1488 = vmul.f32 %v1424, 0.7978846
        %v1489 = vmul.f32 %v1425, 0.7978846
        %v1490 = vmul.f32 %v1426, 0.7978846
        %v1491 = vmul.f32 %v1427, 0.7978846
        %v1492 = vmul.f32 %v1428, 0.7978846
        %v1493 = vmul.f32 %v1429, 0.7978846
        %v1494 = vmul.f32 %v1430, 0.7978846
        %v1495 = vmul.f32 %v1431, 0.7978846
        %v1496 = vmul.f32 %v1432, 0.7978846
        %v1497 = vmul.f32 %v1433, 0.7978846
        %v1498 = vmul.f32 %v1434, 0.7978846
        %v1499 = vmul.f32 %v1435, 0.7978846
        %v1500 = vmul.f32 %v1436, 0.7978846
        %v1501 = vmul.f32 %v1437, 0.7978846
        %v1502 = vmul.f32 %v1438, 0.7978846
        %v1503 = vmul.f32 %v1439, 0.7978846
        %v1504 = vmul.f32 %v1440, 0.7978846
        %v1505 = vmul.f32 %v1441, 0.7978846
        %v1506 = vmul.f32 %v1442, 0.7978846
        %v1507 = vmul.f32 %v1443, 0.7978846
        %v1508 = vmul.f32 %v1444, 0.7978846
        %v1509 = vmul.f32 %v1445, 0.7978846
        %v1510 = vmul.f32 %v1446, 0.7978846
        %v1511 = vmul.f32 %v1447, 0.7978846
        %v1512 = vmul.f32 %v1448, 0.7978846
        %v1513 = vmul.f32 %v1449, 0.7978846
        %v1514 = vmul.f32 %v1450, 0.7978846
        %v1515 = vmul.f32 %v1451, 0.7978846
        %v1516 = vmul.f32 %v1452, 0.7978846
        %v1517 = vmul.f32 %v1453, 0.7978846
        %v1518 = vmul.f32 %v1454, 0.7978846
        %v1519 = vmul.f32 %v1455, 0.7978846
        %v1520 = vmul.f32 %v1456, 0.7978846
        %v1521 = vmul.f32 %v1457, 0.7978846
        %v1522 = vmul.f32 %v1458, 0.7978846
        %v1523 = vmul.f32 %v1459, 0.7978846
        %v1524 = vmul.f32 %v1460, 0.7978846
        %v1525 = vmul.f32 %v1461, 0.7978846
        %v1526 = vmul.f32 %v1462, 0.7978846
        %v1527 = vmul.f32 %v1463, 0.7978846
        %v1528 = vmul.f32 %v1464, 0.7978846
        %v1529 = vmul.f32 %v1465, 0.7978846
        %v1530 = vmul.f32 %v1466, 0.7978846
        %v1531 = vmul.f32 %v1467, 0.7978846
        %v1532 = vmul.f32 %v1468, 0.7978846
        %v1533 = vmul.f32 %v1469, 0.7978846
        %v1534 = vmul.f32 %v1470, 0.7978846
        %v1535 = vmul.f32 %v1471, 0.7978846
        %v1536 = vmul.f32 %v1472, 0.7978846
        %v1537 = vmul.f32 %v963, 0.5
        %v1538 = vmul.f32 %v966, 0.5
        %v1539 = vmul.f32 %v971, 0.5
        %v1540 = vmul.f32 %v974, 0.5
        %v1541 = vmul.f32 %v979, 0.5
        %v1542 = vmul.f32 %v982, 0.5
        %v1543 = vmul.f32 %v987, 0.5
        %v1544 = vmul.f32 %v990, 0.5
        %v1545 = vmul.f32 %v995, 0.5
        %v1546 = vmul.f32 %v998, 0.5
        %v1547 = vmul.f32 %v1003, 0.5
        %v1548 = vmul.f32 %v1006, 0.5
        %v1549 = vmul.f32 %v1011, 0.5
        %v1550 = vmul.f32 %v1014, 0.5
        %v1551 = vmul.f32 %v1019, 0.5
        %v1552 = vmul.f32 %v1022, 0.5
        %v1553 = vmul.f32 %v1027, 0.5
        %v1554 = vmul.f32 %v1030, 0.5
        %v1555 = vmul.f32 %v1035, 0.5
        %v1556 = vmul.f32 %v1038, 0.5
        %v1557 = vmul.f32 %v1043, 0.5
        %v1558 = vmul.f32 %v1046, 0.5
        %v1559 = vmul.f32 %v1051, 0.5
        %v1560 = vmul.f32 %v1054, 0.5
        %v1561 = vmul.f32 %v1059, 0.5
        %v1562 = vmul.f32 %v1062, 0.5
        %v1563 = vmul.f32 %v1067, 0.5
        %v1564 = vmul.f32 %v1070, 0.5
        %v1565 = vmul.f32 %v1075, 0.5
        %v1566 = vmul.f32 %v1078, 0.5
        %v1567 = vmul.f32 %v1083, 0.5
        %v1568 = vmul.f32 %v1086, 0.5
        %v1569 = vmul.f32 %v1091, 0.5
        %v1570 = vmul.f32 %v1094, 0.5
        %v1571 = vmul.f32 %v1099, 0.5
        %v1572 = vmul.f32 %v1102, 0.5
        %v1573 = vmul.f32 %v1107, 0.5
        %v1574 = vmul.f32 %v1110, 0.5
        %v1575 = vmul.f32 %v1115, 0.5
        %v1576 = vmul.f32 %v1118, 0.5
        %v1577 = vmul.f32 %v1123, 0.5
        %v1578 = vmul.f32 %v1126, 0.5
        %v1579 = vmul.f32 %v1131, 0.5
        %v1580 = vmul.f32 %v1134, 0.5
        %v1581 = vmul.f32 %v1139, 0.5
        %v1582 = vmul.f32 %v1142, 0.5
        %v1583 = vmul.f32 %v1147, 0.5
        %v1584 = vmul.f32 %v1150, 0.5
        %v1585 = vmul.f32 %v1155, 0.5
        %v1586 = vmul.f32 %v1158, 0.5
        %v1587 = vmul.f32 %v1163, 0.5
        %v1588 = vmul.f32 %v1166, 0.5
        %v1589 = vmul.f32 %v1171, 0.5
        %v1590 = vmul.f32 %v1174, 0.5
        %v1591 = vmul.f32 %v1179, 0.5
        %v1592 = vmul.f32 %v1182, 0.5
        %v1593 = vmul.f32 %v1187, 0.5
        %v1594 = vmul.f32 %v1190, 0.5
        %v1595 = vmul.f32 %v1195, 0.5
        %v1596 = vmul.f32 %v1198, 0.5
        %v1597 = vmul.f32 %v1203, 0.5
        %v1598 = vmul.f32 %v1206, 0.5
        %v1599 = vmul.f32 %v1211, 0.5
        %v1600 = vmul.f32 %v1214, 0.5
        %v1601 = vtanh.pop %v1473
        %v1602 = vtanh.pop %v1474
        %v1603 = vtanh.pop %v1475
        %v1604 = vtanh.pop %v1476
        %v1605 = vtanh.pop %v1477
        %v1606 = vtanh.pop %v1478
        %v1607 = vtanh.pop %v1479
        %v1608 = vtanh.pop %v1480
        %v1609 = vtanh.pop %v1481
        %v1610 = vtanh.pop %v1482
        %v1611 = vtanh.pop %v1483
        %v1612 = vtanh.pop %v1484
        %v1613 = vtanh.pop %v1485
        %v1614 = vtanh.pop %v1486
        %v1615 = vtanh.pop %v1487
        %v1616 = vtanh.pop %v1488
        %v1617 = vtanh.pop %v1489
        %v1618 = vtanh.pop %v1490
        %v1619 = vtanh.pop %v1491
        %v1620 = vtanh.pop %v1492
        %v1621 = vtanh.pop %v1493
        %v1622 = vtanh.pop %v1494
        %v1623 = vtanh.pop %v1495
        %v1624 = vtanh.pop %v1496
        %v1625 = vtanh.pop %v1497
        %v1626 = vtanh.pop %v1498
        %v1627 = vtanh.pop %v1499
        %v1628 = vtanh.pop %v1500
        %v1629 = vtanh.pop %v1501
        %v1630 = vtanh.pop %v1502
        %v1631 = vtanh.pop %v1503
        %v1632 = vtanh.pop %v1504
        %v1633 = vtanh.pop %v1505
        %v1634 = vtanh.pop %v1506
        %v1635 = vtanh.pop %v1507
        %v1636 = vtanh.pop %v1508
        %v1637 = vtanh.pop %v1509
        %v1638 = vtanh.pop %v1510
        %v1639 = vtanh.pop %v1511
        %v1640 = vtanh.pop %v1512
        %v1641 = vtanh.pop %v1513
        %v1642 = vtanh.pop %v1514
        %v1643 = vtanh.pop %v1515
        %v1644 = vtanh.pop %v1516
        %v1645 = vtanh.pop %v1517
        %v1646 = vtanh.pop %v1518
        %v1647 = vtanh.pop %v1519
        %v1648 = vtanh.pop %v1520
        %v1649 = vtanh.pop %v1521
        %v1650 = vtanh.pop %v1522
        %v1651 = vtanh.pop %v1523
        %v1652 = vtanh.pop %v1524
        %v1653 = vtanh.pop %v1525
        %v1654 = vtanh.pop %v1526
        %v1655 = vtanh.pop %v1527
        %v1656 = vtanh.pop %v1528
        %v1657 = vtanh.pop %v1529
        %v1658 = vtanh.pop %v1530
        %v1659 = vtanh.pop %v1531
        %v1660 = vtanh.pop %v1532
        %v1661 = vtanh.pop %v1533
        %v1662 = vtanh.pop %v1534
        %v1663 = vtanh.pop %v1535
        %v1664 = vtanh.pop %v1536
        %v1665 = vadd.f32 %v1601, 1.0
        %v1666 = vadd.f32 %v1602, 1.0
        %v1667 = vadd.f32 %v1603, 1.0
        %v1668 = vadd.f32 %v1604, 1.0
        %v1669 = vadd.f32 %v1605, 1.0
        %v1670 = vadd.f32 %v1606, 1.0
        %v1671 = vadd.f32 %v1607, 1.0
        %v1672 = vadd.f32 %v1608, 1.0
        %v1673 = vadd.f32 %v1609, 1.0
        %v1674 = vadd.f32 %v1610, 1.0
        %v1675 = vadd.f32 %v1611, 1.0
        %v1676 = vadd.f32 %v1612, 1.0
        %v1677 = vadd.f32 %v1613, 1.0
        %v1678 = vadd.f32 %v1614, 1.0
        %v1679 = vadd.f32 %v1615, 1.0
        %v1680 = vadd.f32 %v1616, 1.0
        %v1681 = vadd.f32 %v1617, 1.0
        %v1682 = vadd.f32 %v1618, 1.0
        %v1683 = vadd.f32 %v1619, 1.0
        %v1684 = vadd.f32 %v1620, 1.0
        %v1685 = vadd.f32 %v1621, 1.0
        %v1686 = vadd.f32 %v1622, 1.0
        %v1687 = vadd.f32 %v1623, 1.0
        %v1688 = vadd.f32 %v1624, 1.0
        %v1689 = vadd.f32 %v1625, 1.0
        %v1690 = vadd.f32 %v1626, 1.0
        %v1691 = vadd.f32 %v1627, 1.0
        %v1692 = vadd.f32 %v1628, 1.0
        %v1693 = vadd.f32 %v1629, 1.0
        %v1694 = vadd.f32 %v1630, 1.0
        %v1695 = vadd.f32 %v1631, 1.0
        %v1696 = vadd.f32 %v1632, 1.0
        %v1697 = vadd.f32 %v1633, 1.0
        %v1698 = vadd.f32 %v1634, 1.0
        %v1699 = vadd.f32 %v1635, 1.0
        %v1700 = vadd.f32 %v1636, 1.0
        %v1701 = vadd.f32 %v1637, 1.0
        %v1702 = vadd.f32 %v1638, 1.0
        %v1703 = vadd.f32 %v1639, 1.0
        %v1704 = vadd.f32 %v1640, 1.0
        %v1705 = vadd.f32 %v1641, 1.0
        %v1706 = vadd.f32 %v1642, 1.0
        %v1707 = vadd.f32 %v1643, 1.0
        %v1708 = vadd.f32 %v1644, 1.0
        %v1709 = vadd.f32 %v1645, 1.0
        %v1710 = vadd.f32 %v1646, 1.0
        %v1711 = vadd.f32 %v1647, 1.0
        %v1712 = vadd.f32 %v1648, 1.0
        %v1713 = vadd.f32 %v1649, 1.0
        %v1714 = vadd.f32 %v1650, 1.0
        %v1715 = vadd.f32 %v1651, 1.0
        %v1716 = vadd.f32 %v1652, 1.0
        %v1717 = vadd.f32 %v1653, 1.0
        %v1718 = vadd.f32 %v1654, 1.0
        %v1719 = vadd.f32 %v1655, 1.0
        %v1720 = vadd.f32 %v1656, 1.0
        %v1721 = vadd.f32 %v1657, 1.0
        %v1722 = vadd.f32 %v1658, 1.0
        %v1723 = vadd.f32 %v1659, 1.0
        %v1724 = vadd.f32 %v1660, 1.0
        %v1725 = vadd.f32 %v1661, 1.0
        %v1726 = vadd.f32 %v1662, 1.0
        %v1727 = vadd.f32 %v1663, 1.0
        %v1728 = vadd.f32 %v1664, 1.0
        %v1729 = vmul.f32 %v1537, %v1665
        %v1730 = vmul.f32 %v1538, %v1666
        %v1731 = vmul.f32 %v1539, %v1667
        %v1732 = vmul.f32 %v1540, %v1668
        %v1733 = vmul.f32 %v1541, %v1669
        %v1734 = vmul.f32 %v1542, %v1670
        %v1735 = vmul.f32 %v1543, %v1671
        %v1736 = vmul.f32 %v1544, %v1672
        %v1737 = vmul.f32 %v1545, %v1673
        %v1738 = vmul.f32 %v1546, %v1674
        %v1739 = vmul.f32 %v1547, %v1675
        %v1740 = vmul.f32 %v1548, %v1676
        %v1741 = vmul.f32 %v1549, %v1677
        %v1742 = vmul.f32 %v1550, %v1678
        %v1743 = vmul.f32 %v1551, %v1679
        %v1744 = vmul.f32 %v1552, %v1680
        %v1745 = vmul.f32 %v1553, %v1681
        %v1746 = vmul.f32 %v1554, %v1682
        %v1747 = vmul.f32 %v1555, %v1683
        %v1748 = vmul.f32 %v1556, %v1684
        %v1749 = vmul.f32 %v1557, %v1685
        %v1750 = vmul.f32 %v1558, %v1686
        %v1751 = vmul.f32 %v1559, %v1687
        %v1752 = vmul.f32 %v1560, %v1688
        %v1753 = vmul.f32 %v1561, %v1689
        %v1754 = vmul.f32 %v1562, %v1690
        %v1755 = vmul.f32 %v1563, %v1691
        %v1756 = vmul.f32 %v1564, %v1692
        %v1757 = vmul.f32 %v1565, %v1693
        %v1758 = vmul.f32 %v1566, %v1694
        %v1759 = vmul.f32 %v1567, %v1695
        %v1760 = vmul.f32 %v1568, %v1696
        %v1761 = vmul.f32 %v1569, %v1697
        %v1762 = vmul.f32 %v1570, %v1698
        %v1763 = vmul.f32 %v1571, %v1699
        %v1764 = vmul.f32 %v1572, %v1700
        %v1765 = vmul.f32 %v1573, %v1701
        %v1766 = vmul.f32 %v1574, %v1702
        %v1767 = vmul.f32 %v1575, %v1703
        %v1768 = vmul.f32 %v1576, %v1704
        %v1769 = vmul.f32 %v1577, %v1705
        %v1770 = vmul.f32 %v1578, %v1706
        %v1771 = vmul.f32 %v1579, %v1707
        %v1772 = vmul.f32 %v1580, %v1708
        %v1773 = vmul.f32 %v1581, %v1709
        %v1774 = vmul.f32 %v1582, %v1710
        %v1775 = vmul.f32 %v1583, %v1711
        %v1776 = vmul.f32 %v1584, %v1712
        %v1777 = vmul.f32 %v1585, %v1713
        %v1778 = vmul.f32 %v1586, %v1714
        %v1779 = vmul.f32 %v1587, %v1715
        %v1780 = vmul.f32 %v1588, %v1716
        %v1781 = vmul.f32 %v1589, %v1717
        %v1782 = vmul.f32 %v1590, %v1718
        %v1783 = vmul.f32 %v1591, %v1719
        %v1784 = vmul.f32 %v1592, %v1720
        %v1785 = vmul.f32 %v1593, %v1721
        %v1786 = vmul.f32 %v1594, %v1722
        %v1787 = vmul.f32 %v1595, %v1723
        %v1788 = vmul.f32 %v1596, %v1724
        %v1789 = vmul.f32 %v1597, %v1725
        %v1790 = vmul.f32 %v1598, %v1726
        %v1791 = vmul.f32 %v1599, %v1727
        %v1792 = vmul.f32 %v1600, %v1728
        %v1793 = vld [vmem:[#allocation2] sm:$0xff]
        %v1794 = vld [vmem:[#allocation2 + $0x8] sm:$0xff]
        %v1795 = vld [vmem:[#allocation2 + $0x10] sm:$0xff]
        %v1796 = vld [vmem:[#allocation2 + $0x18] sm:$0xff]
        %v1797 = vld [vmem:[#allocation2 + $0x20] sm:$0xff]
        %v1798 = vld [vmem:[#allocation2 + $0x28] sm:$0xff]
        %v1799 = vld [vmem:[#allocation2 + $0x30] sm:$0xff]
        %v1800 = vld [vmem:[#allocation2 + $0x38] sm:$0xff]
        %v1801 = vld [vmem:[#allocation2 + $0x40] sm:$0xff]
        %v1802 = vld [vmem:[#allocation2 + $0x48] sm:$0xff]
        %v1803 = vld [vmem:[#allocation2 + $0x50] sm:$0xff]
        %v1804 = vld [vmem:[#allocation2 + $0x58] sm:$0xff]
        %v1805 = vld [vmem:[#allocation2 + $0x60] sm:$0xff]
        %v1806 = vld [vmem:[#allocation2 + $0x68] sm:$0xff]
        %v1807 = vld [vmem:[#allocation2 + $0x70] sm:$0xff]
        %v1808 = vld [vmem:[#allocation2 + $0x78] sm:$0xff]
        %v1809 = vld [vmem:[#allocation2 + $0x80] sm:$0xff]
        %v1810 = vld [vmem:[#allocation2 + $0x88] sm:$0xff]
        %v1811 = vld [vmem:[#allocation2 + $0x90] sm:$0xff]
        %v1812 = vld [vmem:[#allocation2 + $0x98] sm:$0xff]
        %v1813 = vld [vmem:[#allocation2 + $0xa0] sm:$0xff]
        %v1814 = vld [vmem:[#allocation2 + $0xa8] sm:$0xff]
        %v1815 = vld [vmem:[#allocation2 + $0xb0] sm:$0xff]
        %v1816 = vld [vmem:[#allocation2 + $0xb8] sm:$0xff]
        %v1817 = vld [vmem:[#allocation2 + $0xc0] sm:$0xff]
        %v1818 = vld [vmem:[#allocation2 + $0xc8] sm:$0xff]
        %v1819 = vld [vmem:[#allocation2 + $0xd0] sm:$0xff]
        %v1820 = vld [vmem:[#allocation2 + $0xd8] sm:$0xff]
        %v1821 = vld [vmem:[#allocation2 + $0xe0] sm:$0xff]
        %v1822 = vld [vmem:[#allocation2 + $0xe8] sm:$0xff]
        %v1823 = vld [vmem:[#allocation2 + $0xf0] sm:$0xff]
        %v1824 = vld [vmem:[#allocation2 + $0xf8] sm:$0xff]
        %v1825 = vpack.c.bf16 %v1730, %v1729
        %v1826 = vpack.c.bf16 %v1732, %v1731
        %v1827 = vpack.c.bf16 %v1734, %v1733
        %v1828 = vpack.c.bf16 %v1736, %v1735
        %v1829 = vpack.c.bf16 %v1738, %v1737
        %v1830 = vpack.c.bf16 %v1740, %v1739
        %v1831 = vpack.c.bf16 %v1742, %v1741
        %v1832 = vpack.c.bf16 %v1744, %v1743
        %v1833 = vpack.c.bf16 %v1746, %v1745
        %v1834 = vpack.c.bf16 %v1748, %v1747
        %v1835 = vpack.c.bf16 %v1750, %v1749
        %v1836 = vpack.c.bf16 %v1752, %v1751
        %v1837 = vpack.c.bf16 %v1754, %v1753
        %v1838 = vpack.c.bf16 %v1756, %v1755
        %v1839 = vpack.c.bf16 %v1758, %v1757
        %v1840 = vpack.c.bf16 %v1760, %v1759
        %v1841 = vpack.c.bf16 %v1762, %v1761
        %v1842 = vpack.c.bf16 %v1764, %v1763
        %v1843 = vpack.c.bf16 %v1766, %v1765
        %v1844 = vpack.c.bf16 %v1768, %v1767
        %v1845 = vpack.c.bf16 %v1770, %v1769
        %v1846 = vpack.c.bf16 %v1772, %v1771
        %v1847 = vpack.c.bf16 %v1774, %v1773
        %v1848 = vpack.c.bf16 %v1776, %v1775
        %v1849 = vpack.c.bf16 %v1778, %v1777
        %v1850 = vpack.c.bf16 %v1780, %v1779
        %v1851 = vpack.c.bf16 %v1782, %v1781
        %v1852 = vpack.c.bf16 %v1784, %v1783
        %v1853 = vpack.c.bf16 %v1786, %v1785
        %v1854 = vpack.c.bf16 %v1788, %v1787
        %v1855 = vpack.c.bf16 %v1790, %v1789
        %v1856 = vpack.c.bf16 %v1792, %v1791
        %v1857 = vld [vmem:[%s4] sm:$0xff]
        %v1858 = vld [vmem:[%s4 + $0x8] sm:$0xff]
        %v1859 = vld [vmem:[%s4 + $0x10] sm:$0xff]
        %v1860 = vld [vmem:[%s4 + $0x18] sm:$0xff]
        %v1861 = vld [vmem:[%s4 + $0x20] sm:$0xff]
        %v1862 = vld [vmem:[%s4 + $0x28] sm:$0xff]
        %v1863 = vld [vmem:[%s4 + $0x30] sm:$0xff]
        %v1864 = vld [vmem:[%s4 + $0x38] sm:$0xff]
        %v1865 = vld [vmem:[%s4 + $0x40] sm:$0xff]
        %v1866 = vld [vmem:[%s4 + $0x48] sm:$0xff]
        %v1867 = vld [vmem:[%s4 + $0x50] sm:$0xff]
        %v1868 = vld [vmem:[%s4 + $0x58] sm:$0xff]
        %v1869 = vld [vmem:[%s4 + $0x60] sm:$0xff]
        %v1870 = vld [vmem:[%s4 + $0x68] sm:$0xff]
        %v1871 = vld [vmem:[%s4 + $0x70] sm:$0xff]
        %v1872 = vld [vmem:[%s4 + $0x78] sm:$0xff]
        %1874 = vset.pattern.permute.xlu0 0
        %1875 = vperm.xlu0 %1874, %v1857
        %v1876 = vpop.permute.xlu0 %1875
        %1879 = vset.pattern.permute.xlu0 0
        %1880 = vperm.xlu0 %1879, %v1858
        %v1881 = vpop.permute.xlu0 %1880
        %1884 = vset.pattern.permute.xlu0 0
        %1885 = vperm.xlu0 %1884, %v1859
        %v1886 = vpop.permute.xlu0 %1885
        %1889 = vset.pattern.permute.xlu0 0
        %1890 = vperm.xlu0 %1889, %v1860
        %v1891 = vpop.permute.xlu0 %1890
        %1894 = vset.pattern.permute.xlu0 0
        %1895 = vperm.xlu0 %1894, %v1861
        %v1896 = vpop.permute.xlu0 %1895
        %1899 = vset.pattern.permute.xlu0 0
        %1900 = vperm.xlu0 %1899, %v1862
        %v1901 = vpop.permute.xlu0 %1900
        %1904 = vset.pattern.permute.xlu0 0
        %1905 = vperm.xlu0 %1904, %v1863
        %v1906 = vpop.permute.xlu0 %1905
        %1909 = vset.pattern.permute.xlu0 0
        %1910 = vperm.xlu0 %1909, %v1864
        %v1911 = vpop.permute.xlu0 %1910
        %1914 = vset.pattern.permute.xlu0 0
        %1915 = vperm.xlu0 %1914, %v1865
        %v1916 = vpop.permute.xlu0 %1915
        %1919 = vset.pattern.permute.xlu0 0
        %1920 = vperm.xlu0 %1919, %v1866
        %v1921 = vpop.permute.xlu0 %1920
        %1924 = vset.pattern.permute.xlu0 0
        %1925 = vperm.xlu0 %1924, %v1867
        %v1926 = vpop.permute.xlu0 %1925
        %1929 = vset.pattern.permute.xlu0 0
        %1930 = vperm.xlu0 %1929, %v1868
        %v1931 = vpop.permute.xlu0 %1930
        %1934 = vset.pattern.permute.xlu0 0
        %1935 = vperm.xlu0 %1934, %v1869
        %v1936 = vpop.permute.xlu0 %1935
        %1939 = vset.pattern.permute.xlu0 0
        %1940 = vperm.xlu0 %1939, %v1870
        %v1941 = vpop.permute.xlu0 %1940
        %1944 = vset.pattern.permute.xlu0 0
        %1945 = vperm.xlu0 %1944, %v1871
        %v1946 = vpop.permute.xlu0 %1945
        %1949 = vset.pattern.permute.xlu0 0
        %1950 = vperm.xlu0 %1949, %v1872
        %v1951 = vpop.permute.xlu0 %1950
        %v1985 = vunpack.c.l.b16 %v1793
        %v1986 = vunpack.c.h.b16 %v1793
        %v1987 = vunpack.c.l.b16 %v1794
        %v1988 = vunpack.c.h.b16 %v1794
        %v1989 = vunpack.c.l.b16 %v1795
        %v1990 = vunpack.c.h.b16 %v1795
        %v1991 = vunpack.c.l.b16 %v1796
        %v1992 = vunpack.c.h.b16 %v1796
        %v1993 = vunpack.c.l.b16 %v1797
        %v1994 = vunpack.c.h.b16 %v1797
        %v1995 = vunpack.c.l.b16 %v1798
        %v1996 = vunpack.c.h.b16 %v1798
        %v1997 = vunpack.c.l.b16 %v1799
        %v1998 = vunpack.c.h.b16 %v1799
        %v1999 = vunpack.c.l.b16 %v1800
        %v2000 = vunpack.c.h.b16 %v1800
        %v2001 = vunpack.c.l.b16 %v1801
        %v2002 = vunpack.c.h.b16 %v1801
        %v2003 = vunpack.c.l.b16 %v1802
        %v2004 = vunpack.c.h.b16 %v1802
        %v2005 = vunpack.c.l.b16 %v1803
        %v2006 = vunpack.c.h.b16 %v1803
        %v2007 = vunpack.c.l.b16 %v1804
        %v2008 = vunpack.c.h.b16 %v1804
        %v2009 = vunpack.c.l.b16 %v1805
        %v2010 = vunpack.c.h.b16 %v1805
        %v2011 = vunpack.c.l.b16 %v1806
        %v2012 = vunpack.c.h.b16 %v1806
        %v2013 = vunpack.c.l.b16 %v1807
        %v2014 = vunpack.c.h.b16 %v1807
        %v2015 = vunpack.c.l.b16 %v1808
        %v2016 = vunpack.c.h.b16 %v1808
        %v2017 = vunpack.c.l.b16 %v1809
        %v2018 = vunpack.c.h.b16 %v1809
        %v2019 = vunpack.c.l.b16 %v1810
        %v2020 = vunpack.c.h.b16 %v1810
        %v2021 = vunpack.c.l.b16 %v1811
        %v2022 = vunpack.c.h.b16 %v1811
        %v2023 = vunpack.c.l.b16 %v1812
        %v2024 = vunpack.c.h.b16 %v1812
        %v2025 = vunpack.c.l.b16 %v1813
        %v2026 = vunpack.c.h.b16 %v1813
        %v2027 = vunpack.c.l.b16 %v1814
        %v2028 = vunpack.c.h.b16 %v1814
        %v2029 = vunpack.c.l.b16 %v1815
        %v2030 = vunpack.c.h.b16 %v1815
        %v2031 = vunpack.c.l.b16 %v1816
        %v2032 = vunpack.c.h.b16 %v1816
        %v2033 = vunpack.c.l.b16 %v1817
        %v2034 = vunpack.c.h.b16 %v1817
        %v2035 = vunpack.c.l.b16 %v1818
        %v2036 = vunpack.c.h.b16 %v1818
        %v2037 = vunpack.c.l.b16 %v1819
        %v2038 = vunpack.c.h.b16 %v1819
        %v2039 = vunpack.c.l.b16 %v1820
        %v2040 = vunpack.c.h.b16 %v1820
        %v2041 = vunpack.c.l.b16 %v1821
        %v2042 = vunpack.c.h.b16 %v1821
        %v2043 = vunpack.c.l.b16 %v1822
        %v2044 = vunpack.c.h.b16 %v1822
        %v2045 = vunpack.c.l.b16 %v1823
        %v2046 = vunpack.c.h.b16 %v1823
        %v2047 = vunpack.c.l.b16 %v1824
        %v2048 = vunpack.c.h.b16 %v1824
        %v2049 = vpack.c.b16 %v1989, %v1985
        %v2050 = vpack.c.b16 %v1990, %v1986
        %v2051 = vpack.c.b16 %v1991, %v1987
        %v2052 = vpack.c.b16 %v1992, %v1988
        %v2053 = vpack.c.b16 %v1997, %v1993
        %v2054 = vpack.c.b16 %v1998, %v1994
        %v2055 = vpack.c.b16 %v1999, %v1995
        %v2056 = vpack.c.b16 %v2000, %v1996
        %v2057 = vpack.c.b16 %v2005, %v2001
        %v2058 = vpack.c.b16 %v2006, %v2002
        %v2059 = vpack.c.b16 %v2007, %v2003
        %v2060 = vpack.c.b16 %v2008, %v2004
        %v2061 = vpack.c.b16 %v2013, %v2009
        %v2062 = vpack.c.b16 %v2014, %v2010
        %v2063 = vpack.c.b16 %v2015, %v2011
        %v2064 = vpack.c.b16 %v2016, %v2012
        %v2065 = vpack.c.b16 %v2021, %v2017
        %v2066 = vpack.c.b16 %v2022, %v2018
        %v2067 = vpack.c.b16 %v2023, %v2019
        %v2068 = vpack.c.b16 %v2024, %v2020
        %v2069 = vpack.c.b16 %v2029, %v2025
        %v2070 = vpack.c.b16 %v2030, %v2026
        %v2071 = vpack.c.b16 %v2031, %v2027
        %v2072 = vpack.c.b16 %v2032, %v2028
        %v2073 = vpack.c.b16 %v2037, %v2033
        %v2074 = vpack.c.b16 %v2038, %v2034
        %v2075 = vpack.c.b16 %v2039, %v2035
        %v2076 = vpack.c.b16 %v2040, %v2036
        %v2077 = vpack.c.b16 %v2045, %v2041
        %v2078 = vpack.c.b16 %v2046, %v2042
        %v2079 = vpack.c.b16 %v2047, %v2043
        %v2080 = vpack.c.b16 %v2048, %v2044
        %2113 = vmatprep.subr.bf16.mxu0 0
        %2114 = vmatpush1.bf16.msra.mxu0 %v1832
        %2115 = vmatprep.subr.bf16.mxu0 0
        %2116 = vmatpush1.bf16.msra.mxu0 %v1831
        %2117 = vmatprep.subr.bf16.mxu0 0
        %2118 = vmatpush1.bf16.msra.mxu0 %v1830
        %2119 = vmatprep.subr.bf16.mxu0 0
        %2120 = vmatpush1.bf16.msra.mxu0 %v1829
        %2121 = vmatprep.subr.bf16.mxu0 0
        %2122 = vmatpush1.bf16.msra.mxu0 %v1828
        %2123 = vmatprep.subr.bf16.mxu0 0
        %2124 = vmatpush1.bf16.msra.mxu0 %v1827
        %2125 = vmatprep.subr.bf16.mxu0 0
        %2126 = vmatpush1.bf16.msra.mxu0 %v1826
        %2127 = vmatprep.subr.bf16.mxu0 0
        %2128 = vmatpush1.bf16.msra.mxu0 %v1825
        %2129 = vmatprep.subr.bf16.mxu0 0
        %2130 = vmatpush2.bf16.msra.mxu0 %v1840
        %2131 = vmatprep.subr.bf16.mxu0 0
        %2132 = vmatpush2.bf16.msra.mxu0 %v1839
        %2133 = vmatprep.subr.bf16.mxu0 0
        %2134 = vmatpush2.bf16.msra.mxu0 %v1838
        %2135 = vmatprep.subr.bf16.mxu0 0
        %2136 = vmatpush2.bf16.msra.mxu0 %v1837
        %2137 = vmatprep.subr.bf16.mxu0 0
        %2138 = vmatpush2.bf16.msra.mxu0 %v1836
        %2139 = vmatprep.subr.bf16.mxu0 0
        %2140 = vmatpush2.bf16.msra.mxu0 %v1835
        %2141 = vmatprep.subr.bf16.mxu0 0
        %2142 = vmatpush2.bf16.msra.mxu0 %v1834
        %2143 = vmatprep.subr.bf16.mxu0 0
        %2144 = vmatpush2.bf16.msra.mxu0 %v1833
        %2145 = vmatprep.mubr.bf16.mxu0 %v2050
        %2146 = vmatmul.mubr.bf16.gmra.mxu0 %v2049
        %v2147 = vpop.f32.mrf.mxu0
        %v2148 = vadd.f32 %v1876, %v2147
        %v2149 = vpop.f32.mrf.mxu0
        %v2150 = vpop.f32.mrf.mxu0
        %v2151 = vadd.f32 %v1881, %v2150
        %v2152 = vpop.f32.mrf.mxu0
        %2153 = vmatprep.mubr.bf16.mxu0 %v2054
        %2154 = vmatmul.mubr.bf16.gmra.mxu0 %v2053
        %v2155 = vpop.f32.mrf.mxu0
        %v2156 = vadd.f32 %v1886, %v2155
        %v2157 = vpop.f32.mrf.mxu0
        %v2158 = vpop.f32.mrf.mxu0
        %v2159 = vadd.f32 %v1891, %v2158
        %v2160 = vpop.f32.mrf.mxu0
        %2161 = vmatprep.mubr.bf16.mxu0 %v2058
        %2162 = vmatmul.mubr.bf16.gmra.mxu0 %v2057
        %v2163 = vpop.f32.mrf.mxu0
        %v2164 = vadd.f32 %v1896, %v2163
        %v2165 = vpop.f32.mrf.mxu0
        %v2166 = vpop.f32.mrf.mxu0
        %v2167 = vadd.f32 %v1901, %v2166
        %v2168 = vpop.f32.mrf.mxu0
        %2169 = vmatprep.mubr.bf16.mxu0 %v2062
        %2170 = vmatmul.mubr.bf16.gmra.mxu0 %v2061
        %v2171 = vpop.f32.mrf.mxu0
        %v2172 = vadd.f32 %v1906, %v2171
        %v2173 = vpop.f32.mrf.mxu0
        %v2174 = vpop.f32.mrf.mxu0
        %v2175 = vadd.f32 %v1911, %v2174
        %v2176 = vpop.f32.mrf.mxu0
        %2177 = vmatprep.mubr.bf16.mxu0 %v2066
        %2178 = vmatmul.mubr.bf16.gmra.mxu0 %v2065
        %v2179 = vpop.f32.mrf.mxu0
        %v2180 = vadd.f32 %v1916, %v2179
        %v2181 = vpop.f32.mrf.mxu0
        %v2182 = vpop.f32.mrf.mxu0
        %v2183 = vadd.f32 %v1921, %v2182
        %v2184 = vpop.f32.mrf.mxu0
        %2185 = vmatprep.mubr.bf16.mxu0 %v2070
        %2186 = vmatmul.mubr.bf16.gmra.mxu0 %v2069
        %v2187 = vpop.f32.mrf.mxu0
        %v2188 = vadd.f32 %v1926, %v2187
        %v2189 = vpop.f32.mrf.mxu0
        %v2190 = vpop.f32.mrf.mxu0
        %v2191 = vadd.f32 %v1931, %v2190
        %v2192 = vpop.f32.mrf.mxu0
        %2193 = vmatprep.mubr.bf16.mxu0 %v2074
        %2194 = vmatmul.mubr.bf16.gmra.mxu0 %v2073
        %v2195 = vpop.f32.mrf.mxu0
        %v2196 = vadd.f32 %v1936, %v2195
        %v2197 = vpop.f32.mrf.mxu0
        %v2198 = vpop.f32.mrf.mxu0
        %v2199 = vadd.f32 %v1941, %v2198
        %v2200 = vpop.f32.mrf.mxu0
        %2201 = vmatprep.mubr.bf16.mxu0 %v2078
        %2202 = vmatmul.mubr.bf16.gmra.mxu0 %v2077
        %v2203 = vpop.f32.mrf.mxu0
        %v2204 = vadd.f32 %v1946, %v2203
        %v2205 = vpop.f32.mrf.mxu0
        %v2206 = vpop.f32.mrf.mxu0
        %v2207 = vadd.f32 %v1951, %v2206
        %v2208 = vpop.f32.mrf.mxu0
        %2209 = vdwg.mxu0
        %2210 = vmatprep.subr.bf16.mxu0 0
        %2211 = vmatpush1.bf16.msra.mxu0 %v1848
        %2212 = vmatprep.subr.bf16.mxu0 0
        %2213 = vmatpush1.bf16.msra.mxu0 %v1847
        %2214 = vmatprep.subr.bf16.mxu0 0
        %2215 = vmatpush1.bf16.msra.mxu0 %v1846
        %2216 = vmatprep.subr.bf16.mxu0 0
        %2217 = vmatpush1.bf16.msra.mxu0 %v1845
        %2218 = vmatprep.subr.bf16.mxu0 0
        %2219 = vmatpush1.bf16.msra.mxu0 %v1844
        %2220 = vmatprep.subr.bf16.mxu0 0
        %2221 = vmatpush1.bf16.msra.mxu0 %v1843
        %2222 = vmatprep.subr.bf16.mxu0 0
        %2223 = vmatpush1.bf16.msra.mxu0 %v1842
        %2224 = vmatprep.subr.bf16.mxu0 0
        %2225 = vmatpush1.bf16.msra.mxu0 %v1841
        %2226 = vmatprep.subr.bf16.mxu0 0
        %2227 = vmatpush2.bf16.msra.mxu0 %v1856
        %2228 = vmatprep.subr.bf16.mxu0 0
        %2229 = vmatpush2.bf16.msra.mxu0 %v1855
        %2230 = vmatprep.subr.bf16.mxu0 0
        %2231 = vmatpush2.bf16.msra.mxu0 %v1854
        %2232 = vmatprep.subr.bf16.mxu0 0
        %2233 = vmatpush2.bf16.msra.mxu0 %v1853
        %2234 = vmatprep.subr.bf16.mxu0 0
        %2235 = vmatpush2.bf16.msra.mxu0 %v1852
        %2236 = vmatprep.subr.bf16.mxu0 0
        %2237 = vmatpush2.bf16.msra.mxu0 %v1851
        %2238 = vmatprep.subr.bf16.mxu0 0
        %2239 = vmatpush2.bf16.msra.mxu0 %v1850
        %2240 = vmatprep.subr.bf16.mxu0 0
        %2241 = vmatpush2.bf16.msra.mxu0 %v1849
        %2242 = vmatprep.mubr.bf16.mxu0 %v2052
        %2243 = vmatmul.mubr.bf16.gmra.mxu0 %v2051
        %v2244 = vpop.f32.mrf.mxu0
        %v2245 = vadd.f32 %v2148, %v2244
        %v2246 = vpop.f32.mrf.mxu0
        %v2247 = vpop.f32.mrf.mxu0
        %v2248 = vadd.f32 %v2151, %v2247
        %v2249 = vpop.f32.mrf.mxu0
        %2250 = vmatprep.mubr.bf16.mxu0 %v2056
        %2251 = vmatmul.mubr.bf16.gmra.mxu0 %v2055
        %v2252 = vpop.f32.mrf.mxu0
        %v2253 = vadd.f32 %v2156, %v2252
        %v2254 = vpop.f32.mrf.mxu0
        %v2255 = vpop.f32.mrf.mxu0
        %v2256 = vadd.f32 %v2159, %v2255
        %v2257 = vpop.f32.mrf.mxu0
        %2258 = vmatprep.mubr.bf16.mxu0 %v2060
        %2259 = vmatmul.mubr.bf16.gmra.mxu0 %v2059
        %v2260 = vpop.f32.mrf.mxu0
        %v2261 = vadd.f32 %v2164, %v2260
        %v2262 = vpop.f32.mrf.mxu0
        %v2263 = vpop.f32.mrf.mxu0
        %v2264 = vadd.f32 %v2167, %v2263
        %v2265 = vpop.f32.mrf.mxu0
        %2266 = vmatprep.mubr.bf16.mxu0 %v2064
        %2267 = vmatmul.mubr.bf16.gmra.mxu0 %v2063
        %v2268 = vpop.f32.mrf.mxu0
        %v2269 = vadd.f32 %v2172, %v2268
        %v2270 = vpop.f32.mrf.mxu0
        %v2271 = vpop.f32.mrf.mxu0
        %v2272 = vadd.f32 %v2175, %v2271
        %v2273 = vpop.f32.mrf.mxu0
        %2274 = vmatprep.mubr.bf16.mxu0 %v2068
        %2275 = vmatmul.mubr.bf16.gmra.mxu0 %v2067
        %v2276 = vpop.f32.mrf.mxu0
        %v2277 = vadd.f32 %v2180, %v2276
        %v2278 = vpop.f32.mrf.mxu0
        %v2279 = vpop.f32.mrf.mxu0
        %v2280 = vadd.f32 %v2183, %v2279
        %v2281 = vpop.f32.mrf.mxu0
        %2282 = vmatprep.mubr.bf16.mxu0 %v2072
        %2283 = vmatmul.mubr.bf16.gmra.mxu0 %v2071
        %v2284 = vpop.f32.mrf.mxu0
        %v2285 = vadd.f32 %v2188, %v2284
        %v2286 = vpop.f32.mrf.mxu0
        %v2287 = vpop.f32.mrf.mxu0
        %v2288 = vadd.f32 %v2191, %v2287
        %v2289 = vpop.f32.mrf.mxu0
        %2290 = vmatprep.mubr.bf16.mxu0 %v2076
        %2291 = vmatmul.mubr.bf16.gmra.mxu0 %v2075
        %v2292 = vpop.f32.mrf.mxu0
        %v2293 = vadd.f32 %v2196, %v2292
        %v2294 = vpop.f32.mrf.mxu0
        %v2295 = vpop.f32.mrf.mxu0
        %v2296 = vadd.f32 %v2199, %v2295
        %v2297 = vpop.f32.mrf.mxu0
        %2298 = vmatprep.mubr.bf16.mxu0 %v2080
        %2299 = vmatmul.mubr.bf16.gmra.mxu0 %v2079
        %v2300 = vpop.f32.mrf.mxu0
        %v2301 = vadd.f32 %v2204, %v2300
        %v2302 = vpop.f32.mrf.mxu0
        %v2303 = vpop.f32.mrf.mxu0
        %v2304 = vadd.f32 %v2207, %v2303
        %v2305 = vpop.f32.mrf.mxu0
        %2306 = vdwg.mxu0
        %2307 = vst [vmem:[%s254] sm:$0xff] %v2245
        %2308 = vst [vmem:[%s254 + $0x8] sm:$0xff] %v2248
        %2309 = vst [vmem:[%s254 + $0x10] sm:$0xff] %v2253
        %2310 = vst [vmem:[%s254 + $0x18] sm:$0xff] %v2256
        %2311 = vst [vmem:[%s254 + $0x20] sm:$0xff] %v2261
        %2312 = vst [vmem:[%s254 + $0x28] sm:$0xff] %v2264
        %2313 = vst [vmem:[%s254 + $0x30] sm:$0xff] %v2269
        %2314 = vst [vmem:[%s254 + $0x38] sm:$0xff] %v2272
        %2315 = vst [vmem:[%s254 + $0x40] sm:$0xff] %v2277
        %2316 = vst [vmem:[%s254 + $0x48] sm:$0xff] %v2280
        %2317 = vst [vmem:[%s254 + $0x50] sm:$0xff] %v2285
        %2318 = vst [vmem:[%s254 + $0x58] sm:$0xff] %v2288
        %2319 = vst [vmem:[%s254 + $0x60] sm:$0xff] %v2293
        %2320 = vst [vmem:[%s254 + $0x68] sm:$0xff] %v2296
        %2321 = vst [vmem:[%s254 + $0x70] sm:$0xff] %v2301
        %2322 = vst [vmem:[%s254 + $0x78] sm:$0xff] %v2304
        %s2323 = sand.u32 %s154, 1
        %s2324 = scalar_lea.sflag [#allocation4], %s2323
        %s2325 = sand.u32 %s154, 1
        %s2326 = smul.addr %s2325, 128
        %s2327 = scalar_lea.vmem [#allocation5], %s2326
        // Predicated region
        $region45: #{tpu_custom_call.1} parent=39 // pred_check
          %p2328 = pneg %p164
        $region46: #{tpu_custom_call.1} parent=39 // pred_check_branch
          %2330 = sbr.rel (%p2328) target = $region48
        $region47: #{tpu_custom_call.1} parent=39 // pred_region
          %s2332 = ssub.s32 2048, 2048
          %2333 = vsyncadd %s2324, %s2332
          %s2334 = smul.addr %s24, 16
          %s2335 = sadd.s32 %s25, %s2334
          %s2336 = smul.addr %s2335, 128
          %s2337 = scalar_lea.hbm %s5, %s2336
          %s2338 = sshll.u32 %s2327, 4
          %s2339 = int_to_ptr.vmem [resolvable:$true] %s2338
          %2344 = dma.vmem_to_hbm [thread:$0]  %s2339, 2048, %s2337, %s2324, 128, 128, 8
        $region48: #{tpu_custom_call.1} parent=39 // pred_fallthru
          _
      $region40: #{tpu_custom_call.1} parent=5 // pred_fallthru
        _
      %p2345 = scmp.le.s32.totalorder 2, %s15
      // Predicated region
      $region49: #{tpu_custom_call.1} parent=5 // pred_check
        %p2346 = pneg %p2345
      $region50: #{tpu_custom_call.1} parent=5 // pred_check_branch
        %2348 = sbr.rel (%p2346) target = $region52
      $region51: #{tpu_custom_call.1} parent=5 // pred_region
        %s2349 = ssub.s32 %s15, 2
        // Predicated region
        $region53: #{tpu_custom_call.1} parent=51 // pred_check
          %p2350 = pneg %p170
        $region54: #{tpu_custom_call.1} parent=51 // pred_check_branch
          %2352 = sbr.rel (%p2350) target = $region56
        $region55: #{tpu_custom_call.1} parent=51 // pred_region
          %s2353 = sand.u32 %s155, 1
          %s2354 = scalar_lea.sflag [#allocation4], %s2353
          %s2355 = sand.u32 %s155, 1
          %s2356 = smul.addr %s2355, 128
          %s2357 = scalar_lea.vmem [#allocation5], %s2356
          %2358 = dma.done %s2354, 2048
        $region56: #{tpu_custom_call.1} parent=51 // pred_fallthru
          _
      $region52: #{tpu_custom_call.1} parent=5 // pred_fallthru
        _
    $region6: #{tpu_custom_call.1} parent=1 // loop_footer
      %s19 = sadd.s32 1, %s15
    $region7: #{tpu_custom_call.1} parent=1 // loop_footer_branch
      %14 = sbr.rel target = $region3
    $region8: #{tpu_custom_call.1} parent=1 // loop_exit
      _
    %2359 = vsyncpa [#allocation3], 1
    %s2360 = scalar_lea.sflag [#allocation3], 1
    %2361 = vsyncpa %s2360, 1
    %2362 = vsyncpa [#allocation4], 1
    %s2363 = scalar_lea.sflag [#allocation4], 1
    %2364 = vsyncpa %s2363, 1

</llo_original>
